<compile_context>
chip_gen: v6e
topology: v6e:2x2x1
jax: 0.10.0
libtpu: 0.0.40
codegen_flags: <defaults>
</compile_context>

<pallas_src>
import functools
import math

import jax
import jax.numpy as jnp
from jax.experimental import pallas as pl
from jax.experimental.pallas import tpu as pltpu

_LN_EPS = 1e-5
_GELU_C = math.sqrt(2.0 / math.pi)

_ROW_TILE = 256          # default row tile (B*T rows)
_ROW_TILE_LOGITS = 512   # larger row tile for the memory-bound logits kernel
_Q_TILE = 256            # query tile for attention
_LANE_TILE = 512         # target tile for lane-dim tiling (vocab / FFN hidden)
_FFN_RESIDENT_BYTES = 12 * 1024 * 1024   # keep W1+W2 VMEM-resident below this
_VMEM_LIMIT = 48 * 1024 * 1024           # headroom below v7x's 64 MiB VMEM


def _round_up(x, m):
    return ((x + m - 1) // m) * m


def _pick_row_tile(dim, target):
    """Largest multiple-of-8 divisor of `dim` that is <= target (else full dim)."""
    if dim <= target:
        return dim
    best = None
    t = 8
    while t <= target:
        if dim % t == 0:
            best = t
        t += 8
    return best if best is not None else dim


def _pick_lane_tile(dim, target):
    """Largest multiple-of-128 divisor of `dim` that is <= target (else full dim)."""
    if dim <= target:
        return dim
    best = None
    t = 128
    while t <= target:
        if dim % t == 0:
            best = t
        t += 128
    return best if best is not None else dim


def _layernorm(x, g, b):
    mean = jnp.mean(x, axis=-1, keepdims=True)
    var = jnp.mean((x - mean) ** 2, axis=-1, keepdims=True)   # unbiased=False
    return g * ((x - mean) * jax.lax.rsqrt(var + _LN_EPS)) + b


# ---------------------------------------------------------------------------
# Kernel 1: fused LN1 + QKV projection (row-tiled), bf16 Q/K/V outputs.
# The 1/sqrt(head_dim) softmax scale is folded into W_query at init time.
# ---------------------------------------------------------------------------

def _ln_qkv_kernel(x_ref, g_ref, b_ref, wqkv_ref, q_ref, k_ref, v_ref):
    D = x_ref.shape[-1]
    h = _layernorm(x_ref[...], g_ref[...], b_ref[...])
    qkv = jnp.dot(h.astype(jnp.bfloat16), wqkv_ref[...],
                  preferred_element_type=jnp.float32).astype(jnp.bfloat16)
    q_ref[...] = qkv[:, :D]
    k_ref[...] = qkv[:, D:2 * D]
    v_ref[...] = qkv[:, 2 * D:3 * D]


def pallas_ln_qkv(x2d, ln_g, ln_b, wqkv):
    M, D = x2d.shape
    tm = _pick_row_tile(M, _ROW_TILE)
    qkv_shape = jax.ShapeDtypeStruct((M, D), jnp.bfloat16)
    return pl.pallas_call(
        _ln_qkv_kernel,
        out_shape=(qkv_shape, qkv_shape, qkv_shape),
        grid=(M // tm,),
        in_specs=[
            pl.BlockSpec((tm, D), lambda i: (i, 0)),
            pl.BlockSpec((1, D), lambda i: (0, 0)),
            pl.BlockSpec((1, D), lambda i: (0, 0)),
            pl.BlockSpec((D, 3 * D), lambda i: (0, 0)),
        ],
        out_specs=(
            pl.BlockSpec((tm, D), lambda i: (i, 0)),
            pl.BlockSpec((tm, D), lambda i: (i, 0)),
            pl.BlockSpec((tm, D), lambda i: (i, 0)),
        ),
        compiler_params=pltpu.CompilerParams(
            dimension_semantics=("parallel",),
            vmem_limit_bytes=_VMEM_LIMIT),
    )(x2d, ln_g, ln_b, wqkv)


# ---------------------------------------------------------------------------
# Kernel 2: q-tiled causal attention (K/V resident per batch) + out-proj +
# residual.  Grid (B, T//tq), both axes "parallel" (megacore on v7x).
# ---------------------------------------------------------------------------

def _attn_kernel(x_ref, q_ref, k_ref, v_ref, wo_ref, bo_ref, o_ref, acc_ref,
                 *, num_heads):
    tq, D = q_ref.shape
    T = k_ref.shape[0]
    Dh = D // num_heads
    q_start = pl.program_id(1) * tq

    # Causal mask from a (tq,1) vs (1,T) iota compare (shared across heads).
    row = jax.lax.broadcasted_iota(jnp.int32, (tq, 1), 0) + q_start
    col = jax.lax.broadcasted_iota(jnp.int32, (1, T), 1)
    masked = col > row                      # (tq, T) bool, True = masked out
    neg = jnp.float32(-1e30)

    acc_ref[...] = jnp.zeros_like(acc_ref)
    # TODO(synk): process heads in 128-lane pairs (batched dot_general) to better
    # fill the 256-wide MXU on v6e/v7x, and switch to an online-softmax kv-tiled
    # loop for very long contexts; per-head 2-D matmuls with K/V resident are
    # kept here for robust lowering across generations.
    for hd in range(num_heads):
        sl = slice(hd * Dh, (hd + 1) * Dh)
        q_h = q_ref[:, sl]                  # (tq, Dh) bf16 (scale folded into Wq)
        k_h = k_ref[:, sl]                  # (T,  Dh) bf16
        v_h = v_ref[:, sl]                  # (T,  Dh) bf16
        # q @ k^T without an explicit transpose (contract last dims).
        s = jax.lax.dot_general(q_h, k_h, (((1,), (1,)), ((), ())),
                                preferred_element_type=jnp.float32)  # (tq, T)
        s = jnp.where(masked, neg, s)
        m = jnp.max(s, axis=-1, keepdims=True)
        e = jnp.exp(s - m)
        p = e * pl.reciprocal(jnp.sum(e, axis=-1, keepdims=True), approx=True)
        ctx = jnp.dot(p.astype(jnp.bfloat16), v_h,
                      preferred_element_type=jnp.float32)            # (tq, Dh)
        # Accumulate the output projection per head: no concat, lane-dense acc.
        acc_ref[...] += jnp.dot(ctx.astype(jnp.bfloat16), wo_ref[sl, :],
                                preferred_element_type=jnp.float32)
    o_ref[...] = x_ref[...] + acc_ref[...] + bo_ref[...]   # residual + out bias


def pallas_attention(x, q, k, v, wo, bo, num_heads):
    B, T, D = x.shape
    tq = _pick_row_tile(T, _Q_TILE)
    kernel = functools.partial(_attn_kernel, num_heads=num_heads)
    return pl.pallas_call(
        kernel,
        out_shape=jax.ShapeDtypeStruct((B, T, D), jnp.float32),
        grid=(B, T // tq),
        in_specs=[
            pl.BlockSpec((None, tq, D), lambda b, i: (b, i, 0)),   # residual x
            pl.BlockSpec((None, tq, D), lambda b, i: (b, i, 0)),   # Q tile
            pl.BlockSpec((None, T, D), lambda b, i: (b, 0, 0)),    # K (resident)
            pl.BlockSpec((None, T, D), lambda b, i: (b, 0, 0)),    # V (resident)
            pl.BlockSpec((D, D), lambda b, i: (0, 0)),
            pl.BlockSpec((1, D), lambda b, i: (0, 0)),
        ],
        out_specs=pl.BlockSpec((None, tq, D), lambda b, i: (b, i, 0)),
        scratch_shapes=[pltpu.VMEM((tq, D), jnp.float32)],
        compiler_params=pltpu.CompilerParams(
            dimension_semantics=("parallel", "parallel"),
            vmem_limit_bytes=_VMEM_LIMIT),
    )(x, q, k, v, wo, bo)


# ---------------------------------------------------------------------------
# Kernel 3: fused LN2 + Linear + GELU + Linear + residual.
# W1/W2 are VMEM-resident (constant index maps) when they fit; otherwise the
# hidden axis is tiled with an f32 accumulator.  LN2 is hoisted into a bf16
# scratch computed once per row tile.
# ---------------------------------------------------------------------------

def _ffn_kernel(x_ref, g_ref, bln_ref, w1_ref, b1_ref, w2_ref, b2_ref,
                o_ref, h_scr, acc_ref):
    j = pl.program_id(1)

    @pl.when(j == 0)
    def _():
        # LN2 hoisted out of the hidden loop: computed once per row tile.
        h_scr[...] = _layernorm(x_ref[...], g_ref[...],
                                bln_ref[...]).astype(jnp.bfloat16)
        acc_ref[...] = jnp.zeros_like(acc_ref)

    h1 = jnp.dot(h_scr[...], w1_ref[...],
                 preferred_element_type=jnp.float32) + b1_ref[...]
    # GELU (tanh approximation, exactly as in the reference module), f32 math.
    gelu = 0.5 * h1 * (1.0 + jnp.tanh(jnp.float32(_GELU_C) *
                                      (h1 + 0.044715 * h1 * h1 * h1)))
    acc_ref[...] += jnp.dot(gelu.astype(jnp.bfloat16), w2_ref[...],
                            preferred_element_type=jnp.float32)

    @pl.when(j == pl.num_programs(1) - 1)
    def _():
        o_ref[...] = x_ref[...] + acc_ref[...] + b2_ref[...]  # residual + bias


def pallas_ffn_block(x2d, ln_g, ln_b, w1, b1, w2, b2):
    M, D = x2d.shape
    Hh = w1.shape[1]
    w_bytes = 2 * D * Hh * 2                  # W1 + W2 in bf16
    if w_bytes <= _FFN_RESIDENT_BYTES:
        th, tm = Hh, _pick_row_tile(M, _ROW_TILE)      # weights fully resident
    else:
        th, tm = _pick_lane_tile(Hh, _LANE_TILE), _pick_row_tile(M, 2 * _ROW_TILE)
    grid = (M // tm, Hh // th)
    return pl.pallas_call(
        _ffn_kernel,
        out_shape=jax.ShapeDtypeStruct((M, D), jnp.float32),
        grid=grid,
        in_specs=[
            pl.BlockSpec((tm, D), lambda i, j: (i, 0)),
            pl.BlockSpec((1, D), lambda i, j: (0, 0)),
            pl.BlockSpec((1, D), lambda i, j: (0, 0)),
            # (0, j)/(j, 0) index maps: when th == Hh the weight blocks never
            # change, so they are DMA'd once and stay VMEM-resident.
            pl.BlockSpec((D, th), lambda i, j: (0, j)),
            pl.BlockSpec((1, th), lambda i, j: (0, j)),
            pl.BlockSpec((th, D), lambda i, j: (j, 0)),
            pl.BlockSpec((1, D), lambda i, j: (0, 0)),
        ],
        out_specs=pl.BlockSpec((tm, D), lambda i, j: (i, 0)),
        scratch_shapes=[pltpu.VMEM((tm, D), jnp.bfloat16),
                        pltpu.VMEM((tm, D), jnp.float32)],
        compiler_params=pltpu.CompilerParams(
            dimension_semantics=("parallel", "arbitrary"),
            vmem_limit_bytes=_VMEM_LIMIT),
        cost_estimate=pl.CostEstimate(
            flops=4 * M * D * Hh,
            transcendentals=M * Hh,
            bytes_accessed=2 * M * D * 4 + 2 * D * Hh * 2 + (Hh + 2 * D) * 4),
    )(x2d, ln_g, ln_b, w1, b1, w2, b2)


# ---------------------------------------------------------------------------
# Kernel 4: fused final LayerNorm + logits matmul, tiled (rows, vocab).
# W_out's vocab axis is zero-padded to a 128-multiple at init, so the weight
# is always vocab-tiled; the unpadded (M, V) output's edge block is clipped.
# ---------------------------------------------------------------------------

def _ln_logits_kernel(x_ref, g_ref, b_ref, w_ref, o_ref, h_scr):
    @pl.when(pl.program_id(1) == 0)
    def _():
        # Final LN hoisted out of the vocab loop: computed once per row tile.
        h_scr[...] = _layernorm(x_ref[...], g_ref[...],
                                b_ref[...]).astype(jnp.bfloat16)
    o_ref[...] = jnp.dot(h_scr[...], w_ref[...],
                         preferred_element_type=jnp.float32)


def pallas_ln_logits(x2d, ln_g, ln_b, w_out_padded, vocab_size):
    M, D = x2d.shape
    Vp = w_out_padded.shape[1]
    tm = _pick_row_tile(M, _ROW_TILE_LOGITS)
    tn = _pick_lane_tile(Vp, _LANE_TILE)
    grid = (M // tm, Vp // tn)
    # TODO(synk): consider pipeline_mode=pl.Buffered(3) on the weight spec and a
    # bf16 logits output to further cut HBM traffic on this mem-bound epilogue.
    return pl.pallas_call(
        _ln_logits_kernel,
        out_shape=jax.ShapeDtypeStruct((M, vocab_size), jnp.float32),
        grid=grid,
        in_specs=[
            pl.BlockSpec((tm, D), lambda i, j: (i, 0)),
            pl.BlockSpec((1, D), lambda i, j: (0, 0)),
            pl.BlockSpec((1, D), lambda i, j: (0, 0)),
            pl.BlockSpec((D, tn), lambda i, j: (0, j)),
        ],
        out_specs=pl.BlockSpec((tm, tn), lambda i, j: (i, j)),
        scratch_shapes=[pltpu.VMEM((tm, D), jnp.bfloat16)],
        compiler_params=pltpu.CompilerParams(
            dimension_semantics=("parallel", "arbitrary"),
            vmem_limit_bytes=_VMEM_LIMIT),
        cost_estimate=pl.CostEstimate(
            flops=2 * M * D * Vp,
            transcendentals=0,
            bytes_accessed=M * D * 4 + D * Vp * 2 + M * Vp * 4),
    )(x2d, ln_g, ln_b, w_out_padded)


# ---------------------------------------------------------------------------
# Parameter init (deterministic) and full forward pass
# ---------------------------------------------------------------------------

def init_params(cfg, key):
    V, C, D, L, H = (cfg['vocab_size'], cfg['context_length'], cfg['emb_dim'],
                     cfg['n_layers'], cfg['n_heads'])
    Dh = D // H
    V_pad = _round_up(V, 128)

    keys = iter(jax.random.split(key, 3 + 4 * L))

    def nrm(shape, scale=0.02):
        return scale * jax.random.normal(next(keys), shape)

    # W_out's vocab axis is zero-padded so the logits kernel always tiles it.
    w_out = jnp.zeros((D, V_pad), jnp.float32).at[:, :V].set(nrm((D, V)))

    params = {
        'tok_emb': nrm((V, D)),
        'pos_emb': nrm((C, D)),
        'lnf_g': jnp.ones((1, D), jnp.float32),
        'lnf_b': jnp.zeros((1, D), jnp.float32),
        # Matmul weights stored bf16 (MXU-native, halves HBM/VMEM traffic);
        # accumulation stays f32 inside the kernels.
        'w_out': w_out.astype(jnp.bfloat16),
        'blocks': [],
    }
    for _ in range(L):
        wqkv = nrm((D, 3 * D))                 # [Wq | Wk | Wv], qkv_bias=False
        # Fold the 1/sqrt(head_dim) softmax scale into W_query.
        wqkv = wqkv.at[:, :D].multiply(1.0 / math.sqrt(Dh))
        blk = {
            'ln1_g': jnp.ones((1, D), jnp.float32),
            'ln1_b': jnp.zeros((1, D), jnp.float32),
            'wqkv': wqkv.astype(jnp.bfloat16),
            'wo': nrm((D, D)).astype(jnp.bfloat16),
            'bo': jnp.zeros((1, D), jnp.float32),
            'ln2_g': jnp.ones((1, D), jnp.float32),
            'ln2_b': jnp.zeros((1, D), jnp.float32),
            'w1': nrm((D, 4 * D)).astype(jnp.bfloat16),
            'b1': jnp.zeros((1, 4 * D), jnp.float32),
            'w2': nrm((4 * D, D)).astype(jnp.bfloat16),
            'b2': jnp.zeros((1, D), jnp.float32),
        }
        params['blocks'].append(blk)
    return params


def gpt_forward(params, in_idx, cfg):
    B, T = in_idx.shape
    D, H, V = cfg['emb_dim'], cfg['n_heads'], cfg['vocab_size']

    # Embedding gathers stay in plain JAX (data-dependent gather).
    tok = jnp.take(params['tok_emb'], in_idx, axis=0)          # (B, T, D)
    x = tok + params['pos_emb'][:T][None, :, :]
    # drop_emb: identity (drop_rate = 0.0, eval mode)

    for blk in params['blocks']:
        # fused: LN1 + QKV projection (row-tiled, bf16, scale folded into Wq)
        q, k, v = pallas_ln_qkv(x.reshape(B * T, D), blk['ln1_g'], blk['ln1_b'],
                                blk['wqkv'])
        # q-tiled causal attention (K/V resident) + out-proj + residual
        x = pallas_attention(x, q.reshape(B, T, D), k.reshape(B, T, D),
                             v.reshape(B, T, D), blk['wo'], blk['bo'], H)
        # fused: LN2 + Linear + GELU + Linear + residual (weights VMEM-resident)
        x = pallas_ffn_block(x.reshape(B * T, D), blk['ln2_g'], blk['ln2_b'],
                             blk['w1'], blk['b1'], blk['w2'], blk['b2']
                             ).reshape(B, T, D)

    # fused: final LayerNorm + logits matmul (vocab-axis tiled, bias=False)
    logits = pallas_ln_logits(x.reshape(B * T, D), params['lnf_g'],
                              params['lnf_b'], params['w_out'], V)
    return logits.reshape(B, T, V)


# ---------------------------------------------------------------------------

if __name__ == "__main__":
    cfg = {
        'vocab_size': 128,
        'context_length': 8,
        'emb_dim': 32,
        'n_heads': 4,
        'n_layers': 2,
        'drop_rate': 0.0,   # dropout = identity (eval mode)
        'qkv_bias': False,
    }
    B, T = 2, 8

    key = jax.random.PRNGKey(0)
    k_param, k_idx = jax.random.split(key)
    params = init_params(cfg, k_param)
    in_idx = jax.random.randint(k_idx, (B, T), 0, cfg['vocab_size'],
                                dtype=jnp.int32)

    fwd = jax.jit(functools.partial(gpt_forward, cfg=cfg))
    logits = fwd(params, in_idx)
    jax.block_until_ready(logits)

    assert logits.shape == (B, T, cfg['vocab_size'])
    assert logits.dtype == jnp.float32
    assert bool(jnp.all(jnp.isfinite(logits)))
    print("KERNEL_OK")
</pallas_src>

<mosaic_0001>
module attributes {stable_mosaic.version = 11 : i64} {
  func.func @_ln_qkv_kernel(%arg0: i32, %arg1: memref<16x32xf32, #tpu.memory_space<vmem>>, %arg2: memref<1x32xf32, #tpu.memory_space<vmem>>, %arg3: memref<1x32xf32, #tpu.memory_space<vmem>>, %arg4: memref<32x96xbf16, #tpu.memory_space<vmem>>, %arg5: memref<16x32xbf16, #tpu.memory_space<vmem>>, %arg6: memref<16x32xbf16, #tpu.memory_space<vmem>>, %arg7: memref<16x32xbf16, #tpu.memory_space<vmem>>) attributes {dimension_semantics = [#tpu.dimension_semantics<parallel>], iteration_bounds = array<i64: 1>, scalar_prefetch = 0 : i64, scratch_operands = 0 : i64, tpu.core_type = #tpu.core_type<tc>, window_params = [{transform_indices = @transform_0, window_bounds = array<i64: 16, 32>}, {pipeline_mode = #tpu.pipeline_mode<synchronous>, transform_indices = @transform_1, window_bounds = array<i64: 1, 32>}, {pipeline_mode = #tpu.pipeline_mode<synchronous>, transform_indices = @transform_2, window_bounds = array<i64: 1, 32>}, {pipeline_mode = #tpu.pipeline_mode<synchronous>, transform_indices = @transform_3, window_bounds = array<i64: 32, 96>}, {transform_indices = @transform_4, window_bounds = array<i64: 16, 32>}, {transform_indices = @transform_5, window_bounds = array<i64: 16, 32>}, {transform_indices = @transform_6, window_bounds = array<i64: 16, 32>}]} {
    %c0 = arith.constant 0 : index
    %c0_0 = arith.constant 0 : index
    %0 = vector.load %arg1[%c0, %c0_0] : memref<16x32xf32, #tpu.memory_space<vmem>>, vector<16x32xf32>
    %c0_1 = arith.constant 0 : index
    %c0_2 = arith.constant 0 : index
    %1 = vector.load %arg2[%c0_1, %c0_2] : memref<1x32xf32, #tpu.memory_space<vmem>>, vector<1x32xf32>
    %c0_3 = arith.constant 0 : index
    %c0_4 = arith.constant 0 : index
    %2 = vector.load %arg3[%c0_3, %c0_4] : memref<1x32xf32, #tpu.memory_space<vmem>>, vector<1x32xf32>
    %cst = arith.constant dense<0.000000e+00> : vector<16xf32>
    %3 = vector.multi_reduction <add>, %0, %cst [1] : vector<16x32xf32> to vector<16xf32>
    %4 = vector.shape_cast %3 : vector<16xf32> to vector<16x1xf32>
    %cst_5 = arith.constant 3.200000e+01 : f32
    %5 = vector.broadcast %cst_5 : f32 to vector<16x1xf32>
    %6 = arith.divf %4, %5 : vector<16x1xf32>
    %7 = vector.broadcast %6 : vector<16x1xf32> to vector<16x32xf32>
    %8 = arith.subf %0, %7 : vector<16x32xf32>
    %9 = arith.mulf %8, %8 : vector<16x32xf32>
    %cst_6 = arith.constant dense<0.000000e+00> : vector<16xf32>
    %10 = vector.multi_reduction <add>, %9, %cst_6 [1] : vector<16x32xf32> to vector<16xf32>
    %11 = vector.shape_cast %10 : vector<16xf32> to vector<16x1xf32>
    %cst_7 = arith.constant 3.200000e+01 : f32
    %12 = vector.broadcast %cst_7 : f32 to vector<16x1xf32>
    %13 = arith.divf %11, %12 : vector<16x1xf32>
    %14 = vector.broadcast %6 : vector<16x1xf32> to vector<16x32xf32>
    %15 = arith.subf %0, %14 : vector<16x32xf32>
    %cst_8 = arith.constant 9.99999974E-6 : f32
    %16 = vector.broadcast %cst_8 : f32 to vector<16x1xf32>
    %17 = arith.addf %13, %16 : vector<16x1xf32>
    %18 = math.rsqrt %17 : vector<16x1xf32>
    %19 = vector.broadcast %18 : vector<16x1xf32> to vector<16x32xf32>
    %20 = arith.mulf %15, %19 : vector<16x32xf32>
    %21 = vector.broadcast %1 : vector<1x32xf32> to vector<16x32xf32>
    %22 = arith.mulf %21, %20 : vector<16x32xf32>
    %23 = vector.broadcast %2 : vector<1x32xf32> to vector<16x32xf32>
    %24 = arith.addf %22, %23 : vector<16x32xf32>
    %25 = arith.truncf %24 : vector<16x32xf32> to vector<16x32xbf16>
    %c0_9 = arith.constant 0 : index
    %c0_10 = arith.constant 0 : index
    %26 = vector.load %arg4[%c0_9, %c0_10] : memref<32x96xbf16, #tpu.memory_space<vmem>>, vector<32x96xbf16>
    %cst_11 = arith.constant dense<0.000000e+00> : vector<16x96xf32>
    %27 = tpu.matmul %25, %26, %cst_11 {dimension_numbers = #tpu.dot_dimension_numbers<[1], [0], [0], [1], [0, 0, 1, 1], [], []>} : vector<16x32xbf16>, vector<32x96xbf16>, vector<16x96xf32> -> vector<16x96xf32>
    %28 = arith.truncf %27 : vector<16x96xf32> to vector<16x96xbf16>
    %29 = vector.extract_strided_slice %28 {offsets = [0, 0], sizes = [16, 32], strides = [1, 1]} : vector<16x96xbf16> to vector<16x32xbf16>
    %c0_12 = arith.constant 0 : index
    %c0_13 = arith.constant 0 : index
    %30 = vector.load %arg5[%c0_12, %c0_13] : memref<16x32xbf16, #tpu.memory_space<vmem>>, vector<16x32xbf16>
    tpu.vector_store %arg5[%c0_12, %c0_13], %29 {strides = array<i32>} : memref<16x32xbf16, #tpu.memory_space<vmem>>, vector<16x32xbf16>,
    %31 = vector.extract_strided_slice %28 {offsets = [0, 32], sizes = [16, 32], strides = [1, 1]} : vector<16x96xbf16> to vector<16x32xbf16>
    %c0_14 = arith.constant 0 : index
    %c0_15 = arith.constant 0 : index
    %32 = vector.load %arg6[%c0_14, %c0_15] : memref<16x32xbf16, #tpu.memory_space<vmem>>, vector<16x32xbf16>
    tpu.vector_store %arg6[%c0_14, %c0_15], %31 {strides = array<i32>} : memref<16x32xbf16, #tpu.memory_space<vmem>>, vector<16x32xbf16>,
    %33 = vector.extract_strided_slice %28 {offsets = [0, 64], sizes = [16, 32], strides = [1, 1]} : vector<16x96xbf16> to vector<16x32xbf16>
    %c0_16 = arith.constant 0 : index
    %c0_17 = arith.constant 0 : index
    %34 = vector.load %arg7[%c0_16, %c0_17] : memref<16x32xbf16, #tpu.memory_space<vmem>>, vector<16x32xbf16>
    tpu.vector_store %arg7[%c0_16, %c0_17], %33 {strides = array<i32>} : memref<16x32xbf16, #tpu.memory_space<vmem>>, vector<16x32xbf16>,
    return
  }
  func.func @transform_0(%arg0: i32) -> (i32, i32) {
    %c0_i32 = arith.constant 0 : i32
    %c0_i32_0 = arith.constant 0 : i32
    return %arg0, %c0_i32 : i32, i32
  }
  func.func @transform_1(%arg0: i32) -> (i32, i32) {
    %c0_i32 = arith.constant 0 : i32
    %c0_i32_0 = arith.constant 0 : i32
    %c0_i32_1 = arith.constant 0 : i32
    return %c0_i32, %c0_i32_0 : i32, i32
  }
  func.func @transform_2(%arg0: i32) -> (i32, i32) {
    %c0_i32 = arith.constant 0 : i32
    %c0_i32_0 = arith.constant 0 : i32
    %c0_i32_1 = arith.constant 0 : i32
    return %c0_i32, %c0_i32_0 : i32, i32
  }
  func.func @transform_3(%arg0: i32) -> (i32, i32) {
    %c0_i32 = arith.constant 0 : i32
    %c0_i32_0 = arith.constant 0 : i32
    %c0_i32_1 = arith.constant 0 : i32
    return %c0_i32, %c0_i32_0 : i32, i32
  }
  func.func @transform_4(%arg0: i32) -> (i32, i32) {
    %c0_i32 = arith.constant 0 : i32
    %c0_i32_0 = arith.constant 0 : i32
    return %arg0, %c0_i32 : i32, i32
  }
  func.func @transform_5(%arg0: i32) -> (i32, i32) {
    %c0_i32 = arith.constant 0 : i32
    %c0_i32_0 = arith.constant 0 : i32
    return %arg0, %c0_i32 : i32, i32
  }
  func.func @transform_6(%arg0: i32) -> (i32, i32) {
    %c0_i32 = arith.constant 0 : i32
    %c0_i32_0 = arith.constant 0 : i32
    return %arg0, %c0_i32 : i32, i32
  }
}

module attributes {stable_mosaic.version = 11 : i64} {
  func.func @_attn_kernel(%arg0: i32, %arg1: i32, %arg2: memref<1x8x32xf32, #tpu.memory_space<vmem>>, %arg3: memref<1x8x32xbf16, #tpu.memory_space<vmem>>, %arg4: memref<1x8x32xbf16, #tpu.memory_space<vmem>>, %arg5: memref<1x8x32xbf16, #tpu.memory_space<vmem>>, %arg6: memref<32x32xbf16, #tpu.memory_space<vmem>>, %arg7: memref<1x32xf32, #tpu.memory_space<vmem>>, %arg8: memref<1x8x32xf32, #tpu.memory_space<vmem>>, %arg9: memref<8x32xf32, #tpu.memory_space<vmem>>) attributes {dimension_semantics = [#tpu.dimension_semantics<parallel>, #tpu.dimension_semantics<parallel>], iteration_bounds = array<i64: 2, 1>, scalar_prefetch = 0 : i64, scratch_operands = 1 : i64, tpu.core_type = #tpu.core_type<tc>, window_params = [{transform_indices = @transform_0, window_bounds = array<i64: 1, 8, 32>}, {transform_indices = @transform_1, window_bounds = array<i64: 1, 8, 32>}, {transform_indices = @transform_2, window_bounds = array<i64: 1, 8, 32>}, {transform_indices = @transform_3, window_bounds = array<i64: 1, 8, 32>}, {pipeline_mode = #tpu.pipeline_mode<synchronous>, transform_indices = @transform_4, window_bounds = array<i64: 32, 32>}, {pipeline_mode = #tpu.pipeline_mode<synchronous>, transform_indices = @transform_5, window_bounds = array<i64: 1, 32>}, {transform_indices = @transform_6, window_bounds = array<i64: 1, 8, 32>}]} {
    %c8_i32 = arith.constant 8 : i32
    %0 = arith.muli %arg1, %c8_i32 : i32
    %1 = tpu.iota {dimensions = array<i32: 0>} : vector<8x1xi32>
    %2 = vector.broadcast %0 : i32 to vector<8x1xi32>
    %3 = arith.addi %1, %2 : vector<8x1xi32>
    %4 = tpu.iota {dimensions = array<i32: 1>} : vector<1x8xi32>
    %5 = vector.broadcast %4 : vector<1x8xi32> to vector<8x8xi32>
    %6 = vector.broadcast %3 : vector<8x1xi32> to vector<8x8xi32>
    %7 = arith.cmpi sgt, %5, %6 : vector<8x8xi32>
    %cst = arith.constant 0.000000e+00 : f32
    %8 = vector.broadcast %cst : f32 to vector<8x32xf32>
    %c0 = arith.constant 0 : index
    %c0_0 = arith.constant 0 : index
    %9 = vector.load %arg9[%c0, %c0_0] : memref<8x32xf32, #tpu.memory_space<vmem>>, vector<8x32xf32>
    tpu.vector_store %arg9[%c0, %c0_0], %8 {strides = array<i32>} : memref<8x32xf32, #tpu.memory_space<vmem>>, vector<8x32xf32>,
    %c0_1 = arith.constant 0 : index
    %c0_2 = arith.constant 0 : index
    %c0_3 = arith.constant 0 : index
    %10 = vector.load %arg3[%c0_1, %c0_2, %c0_3] : memref<1x8x32xbf16, #tpu.memory_space<vmem>>, vector<1x8x8xbf16>
    %11 = vector.shape_cast %10 : vector<1x8x8xbf16> to vector<8x8xbf16>
    %c0_4 = arith.constant 0 : index
    %c0_5 = arith.constant 0 : index
    %c0_6 = arith.constant 0 : index
    %12 = vector.load %arg4[%c0_4, %c0_5, %c0_6] : memref<1x8x32xbf16, #tpu.memory_space<vmem>>, vector<1x8x8xbf16>
    %13 = vector.shape_cast %12 : vector<1x8x8xbf16> to vector<8x8xbf16>
    %c0_7 = arith.constant 0 : index
    %c0_8 = arith.constant 0 : index
    %c0_9 = arith.constant 0 : index
    %14 = vector.load %arg5[%c0_7, %c0_8, %c0_9] : memref<1x8x32xbf16, #tpu.memory_space<vmem>>, vector<1x8x8xbf16>
    %15 = vector.shape_cast %14 : vector<1x8x8xbf16> to vector<8x8xbf16>
    %cst_10 = arith.constant dense<0.000000e+00> : vector<8x8xf32>
    %16 = tpu.matmul %11, %13, %cst_10 {dimension_numbers = #tpu.dot_dimension_numbers<[1], [1], [0], [0], [0, 0, 1, 0], [], []>} : vector<8x8xbf16>, vector<8x8xbf16>, vector<8x8xf32> -> vector<8x8xf32>
    %cst_11 = arith.constant -1.000000e+30 : f32
    %17 = vector.broadcast %cst_11 : f32 to vector<8x8xf32>
    %18 = arith.select %7, %17, %16 : vector<8x8xi1>, vector<8x8xf32>
    %cst_12 = arith.constant dense<0xFF800000> : vector<8xf32>
    %19 = vector.multi_reduction <maximumf>, %18, %cst_12 [1] : vector<8x8xf32> to vector<8xf32>
    %20 = vector.shape_cast %19 : vector<8xf32> to vector<8x1xf32>
    %21 = vector.broadcast %20 : vector<8x1xf32> to vector<8x8xf32>
    %22 = arith.subf %18, %21 : vector<8x8xf32>
    %23 = math.exp %22 : vector<8x8xf32>
    %cst_13 = arith.constant dense<0.000000e+00> : vector<8xf32>
    %24 = vector.multi_reduction <add>, %23, %cst_13 [1] : vector<8x8xf32> to vector<8xf32>
    %25 = vector.shape_cast %24 : vector<8xf32> to vector<8x1xf32>
    %26 = tpu.reciprocal %25 {approx = true} : vector<8x1xf32> -> vector<8x1xf32>
    %27 = vector.broadcast %26 : vector<8x1xf32> to vector<8x8xf32>
    %28 = arith.mulf %23, %27 : vector<8x8xf32>
    %29 = arith.truncf %28 : vector<8x8xf32> to vector<8x8xbf16>
    %cst_14 = arith.constant dense<0.000000e+00> : vector<8x8xf32>
    %30 = tpu.matmul %29, %15, %cst_14 {dimension_numbers = #tpu.dot_dimension_numbers<[1], [0], [0], [1], [0, 0, 1, 1], [], []>} : vector<8x8xbf16>, vector<8x8xbf16>, vector<8x8xf32> -> vector<8x8xf32>
    %c0_15 = arith.constant 0 : index
    %c0_16 = arith.constant 0 : index
    %31 = vector.load %arg9[%c0_15, %c0_16] : memref<8x32xf32, #tpu.memory_space<vmem>>, vector<8x32xf32>
    %32 = arith.truncf %30 : vector<8x8xf32> to vector<8x8xbf16>
    %c0_17 = arith.constant 0 : index
    %c0_18 = arith.constant 0 : index
    %33 = vector.load %arg6[%c0_17, %c0_18] : memref<32x32xbf16, #tpu.memory_space<vmem>>, vector<8x32xbf16>
    %cst_19 = arith.constant dense<0.000000e+00> : vector<8x32xf32>
    %34 = tpu.matmul %32, %33, %cst_19 {dimension_numbers = #tpu.dot_dimension_numbers<[1], [0], [0], [1], [0, 0, 1, 1], [], []>} : vector<8x8xbf16>, vector<8x32xbf16>, vector<8x32xf32> -> vector<8x32xf32>
    %35 = arith.addf %31, %34 : vector<8x32xf32>
    %c0_20 = arith.constant 0 : index
    %c0_21 = arith.constant 0 : index
    %36 = vector.load %arg9[%c0_20, %c0_21] : memref<8x32xf32, #tpu.memory_space<vmem>>, vector<8x32xf32>
    tpu.vector_store %arg9[%c0_20, %c0_21], %35 {strides = array<i32>} : memref<8x32xf32, #tpu.memory_space<vmem>>, vector<8x32xf32>,
    %c0_22 = arith.constant 0 : index
    %c0_23 = arith.constant 0 : index
    %c8 = arith.constant 8 : index
    %37 = vector.load %arg3[%c0_22, %c0_23, %c8] : memref<1x8x32xbf16, #tpu.memory_space<vmem>>, vector<1x8x8xbf16>
    %38 = vector.shape_cast %37 : vector<1x8x8xbf16> to vector<8x8xbf16>
    %c0_24 = arith.constant 0 : index
    %c0_25 = arith.constant 0 : index
    %c8_26 = arith.constant 8 : index
    %39 = vector.load %arg4[%c0_24, %c0_25, %c8_26] : memref<1x8x32xbf16, #tpu.memory_space<vmem>>, vector<1x8x8xbf16>
    %40 = vector.shape_cast %39 : vector<1x8x8xbf16> to vector<8x8xbf16>
    %c0_27 = arith.constant 0 : index
    %c0_28 = arith.constant 0 : index
    %c8_29 = arith.constant 8 : index
    %41 = vector.load %arg5[%c0_27, %c0_28, %c8_29] : memref<1x8x32xbf16, #tpu.memory_space<vmem>>, vector<1x8x8xbf16>
    %42 = vector.shape_cast %41 : vector<1x8x8xbf16> to vector<8x8xbf16>
    %cst_30 = arith.constant dense<0.000000e+00> : vector<8x8xf32>
    %43 = tpu.matmul %38, %40, %cst_30 {dimension_numbers = #tpu.dot_dimension_numbers<[1], [1], [0], [0], [0, 0, 1, 0], [], []>} : vector<8x8xbf16>, vector<8x8xbf16>, vector<8x8xf32> -> vector<8x8xf32>
    %cst_31 = arith.constant -1.000000e+30 : f32
    %44 = vector.broadcast %cst_31 : f32 to vector<8x8xf32>
    %45 = arith.select %7, %44, %43 : vector<8x8xi1>, vector<8x8xf32>
    %cst_32 = arith.constant dense<0xFF800000> : vector<8xf32>
    %46 = vector.multi_reduction <maximumf>, %45, %cst_32 [1] : vector<8x8xf32> to vector<8xf32>
    %47 = vector.shape_cast %46 : vector<8xf32> to vector<8x1xf32>
    %48 = vector.broadcast %47 : vector<8x1xf32> to vector<8x8xf32>
    %49 = arith.subf %45, %48 : vector<8x8xf32>
    %50 = math.exp %49 : vector<8x8xf32>
    %cst_33 = arith.constant dense<0.000000e+00> : vector<8xf32>
    %51 = vector.multi_reduction <add>, %50, %cst_33 [1] : vector<8x8xf32> to vector<8xf32>
    %52 = vector.shape_cast %51 : vector<8xf32> to vector<8x1xf32>
    %53 = tpu.reciprocal %52 {approx = true} : vector<8x1xf32> -> vector<8x1xf32>
    %54 = vector.broadcast %53 : vector<8x1xf32> to vector<8x8xf32>
    %55 = arith.mulf %50, %54 : vector<8x8xf32>
    %56 = arith.truncf %55 : vector<8x8xf32> to vector<8x8xbf16>
    %cst_34 = arith.constant dense<0.000000e+00> : vector<8x8xf32>
    %57 = tpu.matmul %56, %42, %cst_34 {dimension_numbers = #tpu.dot_dimension_numbers<[1], [0], [0], [1], [0, 0, 1, 1], [], []>} : vector<8x8xbf16>, vector<8x8xbf16>, vector<8x8xf32> -> vector<8x8xf32>
    %c0_35 = arith.constant 0 : index
    %c0_36 = arith.constant 0 : index
    %58 = vector.load %arg9[%c0_35, %c0_36] : memref<8x32xf32, #tpu.memory_space<vmem>>, vector<8x32xf32>
    %59 = arith.truncf %57 : vector<8x8xf32> to vector<8x8xbf16>
    %c8_37 = arith.constant 8 : index
    %c0_38 = arith.constant 0 : index
    %60 = vector.load %arg6[%c8_37, %c0_38] : memref<32x32xbf16, #tpu.memory_space<vmem>>, vector<8x32xbf16>
    %cst_39 = arith.constant dense<0.000000e+00> : vector<8x32xf32>
    %61 = tpu.matmul %59, %60, %cst_39 {dimension_numbers = #tpu.dot_dimension_numbers<[1], [0], [0], [1], [0, 0, 1, 1], [], []>} : vector<8x8xbf16>, vector<8x32xbf16>, vector<8x32xf32> -> vector<8x32xf32>
    %62 = arith.addf %58, %61 : vector<8x32xf32>
    %c0_40 = arith.constant 0 : index
    %c0_41 = arith.constant 0 : index
    %63 = vector.load %arg9[%c0_40, %c0_41] : memref<8x32xf32, #tpu.memory_space<vmem>>, vector<8x32xf32>
    tpu.vector_store %arg9[%c0_40, %c0_41], %62 {strides = array<i32>} : memref<8x32xf32, #tpu.memory_space<vmem>>, vector<8x32xf32>,
    %c0_42 = arith.constant 0 : index
    %c0_43 = arith.constant 0 : index
    %c16 = arith.constant 16 : index
    %64 = vector.load %arg3[%c0_42, %c0_43, %c16] : memref<1x8x32xbf16, #tpu.memory_space<vmem>>, vector<1x8x8xbf16>
    %65 = vector.shape_cast %64 : vector<1x8x8xbf16> to vector<8x8xbf16>
    %c0_44 = arith.constant 0 : index
    %c0_45 = arith.constant 0 : index
    %c16_46 = arith.constant 16 : index
    %66 = vector.load %arg4[%c0_44, %c0_45, %c16_46] : memref<1x8x32xbf16, #tpu.memory_space<vmem>>, vector<1x8x8xbf16>
    %67 = vector.shape_cast %66 : vector<1x8x8xbf16> to vector<8x8xbf16>
    %c0_47 = arith.constant 0 : index
    %c0_48 = arith.constant 0 : index
    %c16_49 = arith.constant 16 : index
    %68 = vector.load %arg5[%c0_47, %c0_48, %c16_49] : memref<1x8x32xbf16, #tpu.memory_space<vmem>>, vector<1x8x8xbf16>
    %69 = vector.shape_cast %68 : vector<1x8x8xbf16> to vector<8x8xbf16>
    %cst_50 = arith.constant dense<0.000000e+00> : vector<8x8xf32>
    %70 = tpu.matmul %65, %67, %cst_50 {dimension_numbers = #tpu.dot_dimension_numbers<[1], [1], [0], [0], [0, 0, 1, 0], [], []>} : vector<8x8xbf16>, vector<8x8xbf16>, vector<8x8xf32> -> vector<8x8xf32>
    %cst_51 = arith.constant -1.000000e+30 : f32
    %71 = vector.broadcast %cst_51 : f32 to vector<8x8xf32>
    %72 = arith.select %7, %71, %70 : vector<8x8xi1>, vector<8x8xf32>
    %cst_52 = arith.constant dense<0xFF800000> : vector<8xf32>
    %73 = vector.multi_reduction <maximumf>, %72, %cst_52 [1] : vector<8x8xf32> to vector<8xf32>
    %74 = vector.shape_cast %73 : vector<8xf32> to vector<8x1xf32>
    %75 = vector.broadcast %74 : vector<8x1xf32> to vector<8x8xf32>
    %76 = arith.subf %72, %75 : vector<8x8xf32>
    %77 = math.exp %76 : vector<8x8xf32>
    %cst_53 = arith.constant dense<0.000000e+00> : vector<8xf32>
    %78 = vector.multi_reduction <add>, %77, %cst_53 [1] : vector<8x8xf32> to vector<8xf32>
    %79 = vector.shape_cast %78 : vector<8xf32> to vector<8x1xf32>
    %80 = tpu.reciprocal %79 {approx = true} : vector<8x1xf32> -> vector<8x1xf32>
    %81 = vector.broadcast %80 : vector<8x1xf32> to vector<8x8xf32>
    %82 = arith.mulf %77, %81 : vector<8x8xf32>
    %83 = arith.truncf %82 : vector<8x8xf32> to vector<8x8xbf16>
    %cst_54 = arith.constant dense<0.000000e+00> : vector<8x8xf32>
    %84 = tpu.matmul %83, %69, %cst_54 {dimension_numbers = #tpu.dot_dimension_numbers<[1], [0], [0], [1], [0, 0, 1, 1], [], []>} : vector<8x8xbf16>, vector<8x8xbf16>, vector<8x8xf32> -> vector<8x8xf32>
    %c0_55 = arith.constant 0 : index
    %c0_56 = arith.constant 0 : index
    %85 = vector.load %arg9[%c0_55, %c0_56] : memref<8x32xf32, #tpu.memory_space<vmem>>, vector<8x32xf32>
    %86 = arith.truncf %84 : vector<8x8xf32> to vector<8x8xbf16>
    %c16_57 = arith.constant 16 : index
    %c0_58 = arith.constant 0 : index
    %87 = vector.load %arg6[%c16_57, %c0_58] : memref<32x32xbf16, #tpu.memory_space<vmem>>, vector<8x32xbf16>
    %cst_59 = arith.constant dense<0.000000e+00> : vector<8x32xf32>
    %88 = tpu.matmul %86, %87, %cst_59 {dimension_numbers = #tpu.dot_dimension_numbers<[1], [0], [0], [1], [0, 0, 1, 1], [], []>} : vector<8x8xbf16>, vector<8x32xbf16>, vector<8x32xf32> -> vector<8x32xf32>
    %89 = arith.addf %85, %88 : vector<8x32xf32>
    %c0_60 = arith.constant 0 : index
    %c0_61 = arith.constant 0 : index
    %90 = vector.load %arg9[%c0_60, %c0_61] : memref<8x32xf32, #tpu.memory_space<vmem>>, vector<8x32xf32>
    tpu.vector_store %arg9[%c0_60, %c0_61], %89 {strides = array<i32>} : memref<8x32xf32, #tpu.memory_space<vmem>>, vector<8x32xf32>,
    %c0_62 = arith.constant 0 : index
    %c0_63 = arith.constant 0 : index
    %c24 = arith.constant 24 : index
    %91 = vector.load %arg3[%c0_62, %c0_63, %c24] : memref<1x8x32xbf16, #tpu.memory_space<vmem>>, vector<1x8x8xbf16>
    %92 = vector.shape_cast %91 : vector<1x8x8xbf16> to vector<8x8xbf16>
    %c0_64 = arith.constant 0 : index
    %c0_65 = arith.constant 0 : index
    %c24_66 = arith.constant 24 : index
    %93 = vector.load %arg4[%c0_64, %c0_65, %c24_66] : memref<1x8x32xbf16, #tpu.memory_space<vmem>>, vector<1x8x8xbf16>
    %94 = vector.shape_cast %93 : vector<1x8x8xbf16> to vector<8x8xbf16>
    %c0_67 = arith.constant 0 : index
    %c0_68 = arith.constant 0 : index
    %c24_69 = arith.constant 24 : index
    %95 = vector.load %arg5[%c0_67, %c0_68, %c24_69] : memref<1x8x32xbf16, #tpu.memory_space<vmem>>, vector<1x8x8xbf16>
    %96 = vector.shape_cast %95 : vector<1x8x8xbf16> to vector<8x8xbf16>
    %cst_70 = arith.constant dense<0.000000e+00> : vector<8x8xf32>
    %97 = tpu.matmul %92, %94, %cst_70 {dimension_numbers = #tpu.dot_dimension_numbers<[1], [1], [0], [0], [0, 0, 1, 0], [], []>} : vector<8x8xbf16>, vector<8x8xbf16>, vector<8x8xf32> -> vector<8x8xf32>
    %cst_71 = arith.constant -1.000000e+30 : f32
    %98 = vector.broadcast %cst_71 : f32 to vector<8x8xf32>
    %99 = arith.select %7, %98, %97 : vector<8x8xi1>, vector<8x8xf32>
    %cst_72 = arith.constant dense<0xFF800000> : vector<8xf32>
    %100 = vector.multi_reduction <maximumf>, %99, %cst_72 [1] : vector<8x8xf32> to vector<8xf32>
    %101 = vector.shape_cast %100 : vector<8xf32> to vector<8x1xf32>
    %102 = vector.broadcast %101 : vector<8x1xf32> to vector<8x8xf32>
    %103 = arith.subf %99, %102 : vector<8x8xf32>
    %104 = math.exp %103 : vector<8x8xf32>
    %cst_73 = arith.constant dense<0.000000e+00> : vector<8xf32>
    %105 = vector.multi_reduction <add>, %104, %cst_73 [1] : vector<8x8xf32> to vector<8xf32>
    %106 = vector.shape_cast %105 : vector<8xf32> to vector<8x1xf32>
    %107 = tpu.reciprocal %106 {approx = true} : vector<8x1xf32> -> vector<8x1xf32>
    %108 = vector.broadcast %107 : vector<8x1xf32> to vector<8x8xf32>
    %109 = arith.mulf %104, %108 : vector<8x8xf32>
    %110 = arith.truncf %109 : vector<8x8xf32> to vector<8x8xbf16>
    %cst_74 = arith.constant dense<0.000000e+00> : vector<8x8xf32>
    %111 = tpu.matmul %110, %96, %cst_74 {dimension_numbers = #tpu.dot_dimension_numbers<[1], [0], [0], [1], [0, 0, 1, 1], [], []>} : vector<8x8xbf16>, vector<8x8xbf16>, vector<8x8xf32> -> vector<8x8xf32>
    %c0_75 = arith.constant 0 : index
    %c0_76 = arith.constant 0 : index
    %112 = vector.load %arg9[%c0_75, %c0_76] : memref<8x32xf32, #tpu.memory_space<vmem>>, vector<8x32xf32>
    %113 = arith.truncf %111 : vector<8x8xf32> to vector<8x8xbf16>
    %c24_77 = arith.constant 24 : index
    %c0_78 = arith.constant 0 : index
    %114 = vector.load %arg6[%c24_77, %c0_78] : memref<32x32xbf16, #tpu.memory_space<vmem>>, vector<8x32xbf16>
    %cst_79 = arith.constant dense<0.000000e+00> : vector<8x32xf32>
    %115 = tpu.matmul %113, %114, %cst_79 {dimension_numbers = #tpu.dot_dimension_numbers<[1], [0], [0], [1], [0, 0, 1, 1], [], []>} : vector<8x8xbf16>, vector<8x32xbf16>, vector<8x32xf32> -> vector<8x32xf32>
    %116 = arith.addf %112, %115 : vector<8x32xf32>
    %c0_80 = arith.constant 0 : index
    %c0_81 = arith.constant 0 : index
    %117 = vector.load %arg9[%c0_80, %c0_81] : memref<8x32xf32, #tpu.memory_space<vmem>>, vector<8x32xf32>
    tpu.vector_store %arg9[%c0_80, %c0_81], %116 {strides = array<i32>} : memref<8x32xf32, #tpu.memory_space<vmem>>, vector<8x32xf32>,
    %c0_82 = arith.constant 0 : index
    %c0_83 = arith.constant 0 : index
    %c0_84 = arith.constant 0 : index
    %118 = vector.load %arg2[%c0_82, %c0_83, %c0_84] : memref<1x8x32xf32, #tpu.memory_space<vmem>>, vector<1x8x32xf32>
    %119 = vector.shape_cast %118 : vector<1x8x32xf32> to vector<8x32xf32>
    %c0_85 = arith.constant 0 : index
    %c0_86 = arith.constant 0 : index
    %120 = vector.load %arg9[%c0_85, %c0_86] : memref<8x32xf32, #tpu.memory_space<vmem>>, vector<8x32xf32>
    %121 = arith.addf %119, %120 : vector<8x32xf32>
    %c0_87 = arith.constant 0 : index
    %c0_88 = arith.constant 0 : index
    %122 = vector.load %arg7[%c0_87, %c0_88] : memref<1x32xf32, #tpu.memory_space<vmem>>, vector<1x32xf32>
    %123 = vector.broadcast %122 : vector<1x32xf32> to vector<8x32xf32>
    %124 = arith.addf %121, %123 : vector<8x32xf32>
    %c0_89 = arith.constant 0 : index
    %c0_90 = arith.constant 0 : index
    %c0_91 = arith.constant 0 : index
    %125 = vector.load %arg8[%c0_89, %c0_90, %c0_91] : memref<1x8x32xf32, #tpu.memory_space<vmem>>, vector<1x8x32xf32>
    %126 = vector.shape_cast %125 : vector<1x8x32xf32> to vector<8x32xf32>
    %127 = vector.shape_cast %124 : vector<8x32xf32> to vector<1x8x32xf32>
    tpu.vector_store %arg8[%c0_89, %c0_90, %c0_91], %127 {strides = array<i32>} : memref<1x8x32xf32, #tpu.memory_space<vmem>>, vector<1x8x32xf32>,
    return
  }
  func.func @transform_0(%arg0: i32, %arg1: i32) -> (i32, i32, i32) {
    %c0_i32 = arith.constant 0 : i32
    %c0_i32_0 = arith.constant 0 : i32
    return %arg0, %arg1, %c0_i32 : i32, i32, i32
  }
  func.func @transform_1(%arg0: i32, %arg1: i32) -> (i32, i32, i32) {
    %c0_i32 = arith.constant 0 : i32
    %c0_i32_0 = arith.constant 0 : i32
    return %arg0, %arg1, %c0_i32 : i32, i32, i32
  }
  func.func @transform_2(%arg0: i32, %arg1: i32) -> (i32, i32, i32) {
    %c0_i32 = arith.constant 0 : i32
    %c0_i32_0 = arith.constant 0 : i32
    %c0_i32_1 = arith.constant 0 : i32
    return %arg0, %c0_i32, %c0_i32_0 : i32, i32, i32
  }
  func.func @transform_3(%arg0: i32, %arg1: i32) -> (i32, i32, i32) {
    %c0_i32 = arith.constant 0 : i32
    %c0_i32_0 = arith.constant 0 : i32
    %c0_i32_1 = arith.constant 0 : i32
    return %arg0, %c0_i32, %c0_i32_0 : i32, i32, i32
  }
  func.func @transform_4(%arg0: i32, %arg1: i32) -> (i32, i32) {
    %c0_i32 = arith.constant 0 : i32
    %c0_i32_0 = arith.constant 0 : i32
    %c0_i32_1 = arith.constant 0 : i32
    return %c0_i32, %c0_i32_0 : i32, i32
  }
  func.func @transform_5(%arg0: i32, %arg1: i32) -> (i32, i32) {
    %c0_i32 = arith.constant 0 : i32
    %c0_i32_0 = arith.constant 0 : i32
    %c0_i32_1 = arith.constant 0 : i32
    return %c0_i32, %c0_i32_0 : i32, i32
  }
  func.func @transform_6(%arg0: i32, %arg1: i32) -> (i32, i32, i32) {
    %c0_i32 = arith.constant 0 : i32
    %c0_i32_0 = arith.constant 0 : i32
    return %arg0, %arg1, %c0_i32 : i32, i32, i32
  }
}

module attributes {stable_mosaic.version = 11 : i64} {
  func.func @_ffn_kernel(%arg0: i32, %arg1: i32, %arg2: memref<16x32xf32, #tpu.memory_space<vmem>>, %arg3: memref<1x32xf32, #tpu.memory_space<vmem>>, %arg4: memref<1x32xf32, #tpu.memory_space<vmem>>, %arg5: memref<32x128xbf16, #tpu.memory_space<vmem>>, %arg6: memref<1x128xf32, #tpu.memory_space<vmem>>, %arg7: memref<128x32xbf16, #tpu.memory_space<vmem>>, %arg8: memref<1x32xf32, #tpu.memory_space<vmem>>, %arg9: memref<16x32xf32, #tpu.memory_space<vmem>>, %arg10: memref<16x32xbf16, #tpu.memory_space<vmem>>, %arg11: memref<16x32xf32, #tpu.memory_space<vmem>>) attributes {dimension_semantics = [#tpu.dimension_semantics<parallel>, #tpu.dimension_semantics<arbitrary>], iteration_bounds = array<i64: 1, 1>, scalar_prefetch = 0 : i64, scratch_operands = 2 : i64, tpu.core_type = #tpu.core_type<tc>, window_params = [{transform_indices = @transform_0, window_bounds = array<i64: 16, 32>}, {pipeline_mode = #tpu.pipeline_mode<synchronous>, transform_indices = @transform_1, window_bounds = array<i64: 1, 32>}, {pipeline_mode = #tpu.pipeline_mode<synchronous>, transform_indices = @transform_2, window_bounds = array<i64: 1, 32>}, {transform_indices = @transform_3, window_bounds = array<i64: 32, 128>}, {transform_indices = @transform_4, window_bounds = array<i64: 1, 128>}, {transform_indices = @transform_5, window_bounds = array<i64: 128, 32>}, {pipeline_mode = #tpu.pipeline_mode<synchronous>, transform_indices = @transform_6, window_bounds = array<i64: 1, 32>}, {transform_indices = @transform_7, window_bounds = array<i64: 16, 32>}]} {
    %c0_i32 = arith.constant 0 : i32
    %0 = arith.cmpi eq, %arg1, %c0_i32 : i32
    %1 = arith.extui %0 : i1 to i32
    %c0_i32_0 = arith.constant 0 : i32
    %2 = arith.cmpi ne, %1, %c0_i32_0 : i32
    scf.if %2 {
      %c0_19 = arith.constant 0 : index
      %c0_20 = arith.constant 0 : index
      %31 = vector.load %arg2[%c0_19, %c0_20] : memref<16x32xf32, #tpu.memory_space<vmem>>, vector<16x32xf32>
      %c0_21 = arith.constant 0 : index
      %c0_22 = arith.constant 0 : index
      %32 = vector.load %arg3[%c0_21, %c0_22] : memref<1x32xf32, #tpu.memory_space<vmem>>, vector<1x32xf32>
      %c0_23 = arith.constant 0 : index
      %c0_24 = arith.constant 0 : index
      %33 = vector.load %arg4[%c0_23, %c0_24] : memref<1x32xf32, #tpu.memory_space<vmem>>, vector<1x32xf32>
      %cst_25 = arith.constant dense<0.000000e+00> : vector<16xf32>
      %34 = vector.multi_reduction <add>, %31, %cst_25 [1] : vector<16x32xf32> to vector<16xf32>
      %35 = vector.shape_cast %34 : vector<16xf32> to vector<16x1xf32>
      %cst_26 = arith.constant 3.200000e+01 : f32
      %36 = vector.broadcast %cst_26 : f32 to vector<16x1xf32>
      %37 = arith.divf %35, %36 : vector<16x1xf32>
      %38 = vector.broadcast %37 : vector<16x1xf32> to vector<16x32xf32>
      %39 = arith.subf %31, %38 : vector<16x32xf32>
      %40 = arith.mulf %39, %39 : vector<16x32xf32>
      %cst_27 = arith.constant dense<0.000000e+00> : vector<16xf32>
      %41 = vector.multi_reduction <add>, %40, %cst_27 [1] : vector<16x32xf32> to vector<16xf32>
      %42 = vector.shape_cast %41 : vector<16xf32> to vector<16x1xf32>
      %cst_28 = arith.constant 3.200000e+01 : f32
      %43 = vector.broadcast %cst_28 : f32 to vector<16x1xf32>
      %44 = arith.divf %42, %43 : vector<16x1xf32>
      %45 = vector.broadcast %37 : vector<16x1xf32> to vector<16x32xf32>
      %46 = arith.subf %31, %45 : vector<16x32xf32>
      %cst_29 = arith.constant 9.99999974E-6 : f32
      %47 = vector.broadcast %cst_29 : f32 to vector<16x1xf32>
      %48 = arith.addf %44, %47 : vector<16x1xf32>
      %49 = math.rsqrt %48 : vector<16x1xf32>
      %50 = vector.broadcast %49 : vector<16x1xf32> to vector<16x32xf32>
      %51 = arith.mulf %46, %50 : vector<16x32xf32>
      %52 = vector.broadcast %32 : vector<1x32xf32> to vector<16x32xf32>
      %53 = arith.mulf %52, %51 : vector<16x32xf32>
      %54 = vector.broadcast %33 : vector<1x32xf32> to vector<16x32xf32>
      %55 = arith.addf %53, %54 : vector<16x32xf32>
      %56 = arith.truncf %55 : vector<16x32xf32> to vector<16x32xbf16>
      %c0_30 = arith.constant 0 : index
      %c0_31 = arith.constant 0 : index
      %57 = vector.load %arg10[%c0_30, %c0_31] : memref<16x32xbf16, #tpu.memory_space<vmem>>, vector<16x32xbf16>
      tpu.vector_store %arg10[%c0_30, %c0_31], %56 {strides = array<i32>} : memref<16x32xbf16, #tpu.memory_space<vmem>>, vector<16x32xbf16>,
      %cst_32 = arith.constant 0.000000e+00 : f32
      %58 = vector.broadcast %cst_32 : f32 to vector<16x32xf32>
      %c0_33 = arith.constant 0 : index
      %c0_34 = arith.constant 0 : index
      %59 = vector.load %arg11[%c0_33, %c0_34] : memref<16x32xf32, #tpu.memory_space<vmem>>, vector<16x32xf32>
      tpu.vector_store %arg11[%c0_33, %c0_34], %58 {strides = array<i32>} : memref<16x32xf32, #tpu.memory_space<vmem>>, vector<16x32xf32>,
    } else {
    }
    %c0 = arith.constant 0 : index
    %c0_1 = arith.constant 0 : index
    %3 = vector.load %arg10[%c0, %c0_1] : memref<16x32xbf16, #tpu.memory_space<vmem>>, vector<16x32xbf16>
    %c0_2 = arith.constant 0 : index
    %c0_3 = arith.constant 0 : index
    %4 = vector.load %arg5[%c0_2, %c0_3] : memref<32x128xbf16, #tpu.memory_space<vmem>>, vector<32x128xbf16>
    %cst = arith.constant dense<0.000000e+00> : vector<16x128xf32>
    %5 = tpu.matmul %3, %4, %cst {dimension_numbers = #tpu.dot_dimension_numbers<[1], [0], [0], [1], [0, 0, 1, 1], [], []>} : vector<16x32xbf16>, vector<32x128xbf16>, vector<16x128xf32> -> vector<16x128xf32>
    %c0_4 = arith.constant 0 : index
    %c0_5 = arith.constant 0 : index
    %6 = vector.load %arg6[%c0_4, %c0_5] : memref<1x128xf32, #tpu.memory_space<vmem>>, vector<1x128xf32>
    %7 = vector.broadcast %6 : vector<1x128xf32> to vector<16x128xf32>
    %8 = arith.addf %5, %7 : vector<16x128xf32>
    %cst_6 = arith.constant 5.000000e-01 : f32
    %9 = vector.broadcast %cst_6 : f32 to vector<16x128xf32>
    %10 = arith.mulf %9, %8 : vector<16x128xf32>
    %cst_7 = arith.constant 4.471500e-02 : f32
    %11 = vector.broadcast %cst_7 : f32 to vector<16x128xf32>
    %12 = arith.mulf %11, %8 : vector<16x128xf32>
    %13 = arith.mulf %12, %8 : vector<16x128xf32>
    %14 = arith.mulf %13, %8 : vector<16x128xf32>
    %15 = arith.addf %8, %14 : vector<16x128xf32>
    %cst_8 = arith.constant 0.797884583 : f32
    %16 = vector.broadcast %cst_8 : f32 to vector<16x128xf32>
    %17 = arith.mulf %16, %15 : vector<16x128xf32>
    %18 = math.tanh %17 : vector<16x128xf32>
    %cst_9 = arith.constant 1.000000e+00 : f32
    %19 = vector.broadcast %cst_9 : f32 to vector<16x128xf32>
    %20 = arith.addf %19, %18 : vector<16x128xf32>
    %21 = arith.mulf %10, %20 : vector<16x128xf32>
    %c0_10 = arith.constant 0 : index
    %c0_11 = arith.constant 0 : index
    %22 = vector.load %arg11[%c0_10, %c0_11] : memref<16x32xf32, #tpu.memory_space<vmem>>, vector<16x32xf32>
    %23 = arith.truncf %21 : vector<16x128xf32> to vector<16x128xbf16>
    %c0_12 = arith.constant 0 : index
    %c0_13 = arith.constant 0 : index
    %24 = vector.load %arg7[%c0_12, %c0_13] : memref<128x32xbf16, #tpu.memory_space<vmem>>, vector<128x32xbf16>
    %cst_14 = arith.constant dense<0.000000e+00> : vector<16x32xf32>
    %25 = tpu.matmul %23, %24, %cst_14 {dimension_numbers = #tpu.dot_dimension_numbers<[1], [0], [0], [1], [0, 0, 1, 1], [], []>} : vector<16x128xbf16>, vector<128x32xbf16>, vector<16x32xf32> -> vector<16x32xf32>
    %26 = arith.addf %22, %25 : vector<16x32xf32>
    %c0_15 = arith.constant 0 : index
    %c0_16 = arith.constant 0 : index
    %27 = vector.load %arg11[%c0_15, %c0_16] : memref<16x32xf32, #tpu.memory_space<vmem>>, vector<16x32xf32>
    tpu.vector_store %arg11[%c0_15, %c0_16], %26 {strides = array<i32>} : memref<16x32xf32, #tpu.memory_space<vmem>>, vector<16x32xf32>,
    %c0_i32_17 = arith.constant 0 : i32
    %28 = arith.cmpi eq, %arg1, %c0_i32_17 : i32
    %29 = arith.extui %28 : i1 to i32
    %c0_i32_18 = arith.constant 0 : i32
    %30 = arith.cmpi ne, %29, %c0_i32_18 : i32
    scf.if %30 {
      %c0_19 = arith.constant 0 : index
      %c0_20 = arith.constant 0 : index
      %31 = vector.load %arg2[%c0_19, %c0_20] : memref<16x32xf32, #tpu.memory_space<vmem>>, vector<16x32xf32>
      %c0_21 = arith.constant 0 : index
      %c0_22 = arith.constant 0 : index
      %32 = vector.load %arg11[%c0_21, %c0_22] : memref<16x32xf32, #tpu.memory_space<vmem>>, vector<16x32xf32>
      %33 = arith.addf %31, %32 : vector<16x32xf32>
      %c0_23 = arith.constant 0 : index
      %c0_24 = arith.constant 0 : index
      %34 = vector.load %arg8[%c0_23, %c0_24] : memref<1x32xf32, #tpu.memory_space<vmem>>, vector<1x32xf32>
      %35 = vector.broadcast %34 : vector<1x32xf32> to vector<16x32xf32>
      %36 = arith.addf %33, %35 : vector<16x32xf32>
      %c0_25 = arith.constant 0 : index
      %c0_26 = arith.constant 0 : index
      %37 = vector.load %arg9[%c0_25, %c0_26] : memref<16x32xf32, #tpu.memory_space<vmem>>, vector<16x32xf32>
      tpu.vector_store %arg9[%c0_25, %c0_26], %36 {strides = array<i32>} : memref<16x32xf32, #tpu.memory_space<vmem>>, vector<16x32xf32>,
    } else {
    }
    return
  }
  func.func @transform_0(%arg0: i32, %arg1: i32) -> (i32, i32) {
    %c0_i32 = arith.constant 0 : i32
    %c0_i32_0 = arith.constant 0 : i32
    return %arg0, %c0_i32 : i32, i32
  }
  func.func @transform_1(%arg0: i32, %arg1: i32) -> (i32, i32) {
    %c0_i32 = arith.constant 0 : i32
    %c0_i32_0 = arith.constant 0 : i32
    %c0_i32_1 = arith.constant 0 : i32
    return %c0_i32, %c0_i32_0 : i32, i32
  }
  func.func @transform_2(%arg0: i32, %arg1: i32) -> (i32, i32) {
    %c0_i32 = arith.constant 0 : i32
    %c0_i32_0 = arith.constant 0 : i32
    %c0_i32_1 = arith.constant 0 : i32
    return %c0_i32, %c0_i32_0 : i32, i32
  }
  func.func @transform_3(%arg0: i32, %arg1: i32) -> (i32, i32) {
    %c0_i32 = arith.constant 0 : i32
    %c0_i32_0 = arith.constant 0 : i32
    return %c0_i32, %arg1 : i32, i32
  }
  func.func @transform_4(%arg0: i32, %arg1: i32) -> (i32, i32) {
    %c0_i32 = arith.constant 0 : i32
    %c0_i32_0 = arith.constant 0 : i32
    return %c0_i32, %arg1 : i32, i32
  }
  func.func @transform_5(%arg0: i32, %arg1: i32) -> (i32, i32) {
    %c0_i32 = arith.constant 0 : i32
    %c0_i32_0 = arith.constant 0 : i32
    return %arg1, %c0_i32 : i32, i32
  }
  func.func @transform_6(%arg0: i32, %arg1: i32) -> (i32, i32) {
    %c0_i32 = arith.constant 0 : i32
    %c0_i32_0 = arith.constant 0 : i32
    %c0_i32_1 = arith.constant 0 : i32
    return %c0_i32, %c0_i32_0 : i32, i32
  }
  func.func @transform_7(%arg0: i32, %arg1: i32) -> (i32, i32) {
    %c0_i32 = arith.constant 0 : i32
    %c0_i32_0 = arith.constant 0 : i32
    return %arg0, %c0_i32 : i32, i32
  }
}

module attributes {stable_mosaic.version = 11 : i64} {
  func.func @_ln_logits_kernel(%arg0: i32, %arg1: i32, %arg2: memref<16x32xf32, #tpu.memory_space<vmem>>, %arg3: memref<1x32xf32, #tpu.memory_space<vmem>>, %arg4: memref<1x32xf32, #tpu.memory_space<vmem>>, %arg5: memref<32x128xbf16, #tpu.memory_space<vmem>>, %arg6: memref<16x128xf32, #tpu.memory_space<vmem>>, %arg7: memref<16x32xbf16, #tpu.memory_space<vmem>>) attributes {dimension_semantics = [#tpu.dimension_semantics<parallel>, #tpu.dimension_semantics<arbitrary>], iteration_bounds = array<i64: 1, 1>, scalar_prefetch = 0 : i64, scratch_operands = 1 : i64, tpu.core_type = #tpu.core_type<tc>, window_params = [{transform_indices = @transform_0, window_bounds = array<i64: 16, 32>}, {pipeline_mode = #tpu.pipeline_mode<synchronous>, transform_indices = @transform_1, window_bounds = array<i64: 1, 32>}, {pipeline_mode = #tpu.pipeline_mode<synchronous>, transform_indices = @transform_2, window_bounds = array<i64: 1, 32>}, {transform_indices = @transform_3, window_bounds = array<i64: 32, 128>}, {transform_indices = @transform_4, window_bounds = array<i64: 16, 128>}]} {
    %c0_i32 = arith.constant 0 : i32
    %0 = arith.cmpi eq, %arg1, %c0_i32 : i32
    %1 = arith.extui %0 : i1 to i32
    %c0_i32_0 = arith.constant 0 : i32
    %2 = arith.cmpi ne, %1, %c0_i32_0 : i32
    scf.if %2 {
      %c0_6 = arith.constant 0 : index
      %c0_7 = arith.constant 0 : index
      %7 = vector.load %arg2[%c0_6, %c0_7] : memref<16x32xf32, #tpu.memory_space<vmem>>, vector<16x32xf32>
      %c0_8 = arith.constant 0 : index
      %c0_9 = arith.constant 0 : index
      %8 = vector.load %arg3[%c0_8, %c0_9] : memref<1x32xf32, #tpu.memory_space<vmem>>, vector<1x32xf32>
      %c0_10 = arith.constant 0 : index
      %c0_11 = arith.constant 0 : index
      %9 = vector.load %arg4[%c0_10, %c0_11] : memref<1x32xf32, #tpu.memory_space<vmem>>, vector<1x32xf32>
      %cst_12 = arith.constant dense<0.000000e+00> : vector<16xf32>
      %10 = vector.multi_reduction <add>, %7, %cst_12 [1] : vector<16x32xf32> to vector<16xf32>
      %11 = vector.shape_cast %10 : vector<16xf32> to vector<16x1xf32>
      %cst_13 = arith.constant 3.200000e+01 : f32
      %12 = vector.broadcast %cst_13 : f32 to vector<16x1xf32>
      %13 = arith.divf %11, %12 : vector<16x1xf32>
      %14 = vector.broadcast %13 : vector<16x1xf32> to vector<16x32xf32>
      %15 = arith.subf %7, %14 : vector<16x32xf32>
      %16 = arith.mulf %15, %15 : vector<16x32xf32>
      %cst_14 = arith.constant dense<0.000000e+00> : vector<16xf32>
      %17 = vector.multi_reduction <add>, %16, %cst_14 [1] : vector<16x32xf32> to vector<16xf32>
      %18 = vector.shape_cast %17 : vector<16xf32> to vector<16x1xf32>
      %cst_15 = arith.constant 3.200000e+01 : f32
      %19 = vector.broadcast %cst_15 : f32 to vector<16x1xf32>
      %20 = arith.divf %18, %19 : vector<16x1xf32>
      %21 = vector.broadcast %13 : vector<16x1xf32> to vector<16x32xf32>
      %22 = arith.subf %7, %21 : vector<16x32xf32>
      %cst_16 = arith.constant 9.99999974E-6 : f32
      %23 = vector.broadcast %cst_16 : f32 to vector<16x1xf32>
      %24 = arith.addf %20, %23 : vector<16x1xf32>
      %25 = math.rsqrt %24 : vector<16x1xf32>
      %26 = vector.broadcast %25 : vector<16x1xf32> to vector<16x32xf32>
      %27 = arith.mulf %22, %26 : vector<16x32xf32>
      %28 = vector.broadcast %8 : vector<1x32xf32> to vector<16x32xf32>
      %29 = arith.mulf %28, %27 : vector<16x32xf32>
      %30 = vector.broadcast %9 : vector<1x32xf32> to vector<16x32xf32>
      %31 = arith.addf %29, %30 : vector<16x32xf32>
      %32 = arith.truncf %31 : vector<16x32xf32> to vector<16x32xbf16>
      %c0_17 = arith.constant 0 : index
      %c0_18 = arith.constant 0 : index
      %33 = vector.load %arg7[%c0_17, %c0_18] : memref<16x32xbf16, #tpu.memory_space<vmem>>, vector<16x32xbf16>
      tpu.vector_store %arg7[%c0_17, %c0_18], %32 {strides = array<i32>} : memref<16x32xbf16, #tpu.memory_space<vmem>>, vector<16x32xbf16>,
    } else {
    }
    %c0 = arith.constant 0 : index
    %c0_1 = arith.constant 0 : index
    %3 = vector.load %arg7[%c0, %c0_1] : memref<16x32xbf16, #tpu.memory_space<vmem>>, vector<16x32xbf16>
    %c0_2 = arith.constant 0 : index
    %c0_3 = arith.constant 0 : index
    %4 = vector.load %arg5[%c0_2, %c0_3] : memref<32x128xbf16, #tpu.memory_space<vmem>>, vector<32x128xbf16>
    %cst = arith.constant dense<0.000000e+00> : vector<16x128xf32>
    %5 = tpu.matmul %3, %4, %cst {dimension_numbers = #tpu.dot_dimension_numbers<[1], [0], [0], [1], [0, 0, 1, 1], [], []>} : vector<16x32xbf16>, vector<32x128xbf16>, vector<16x128xf32> -> vector<16x128xf32>
    %c0_4 = arith.constant 0 : index
    %c0_5 = arith.constant 0 : index
    %6 = vector.load %arg6[%c0_4, %c0_5] : memref<16x128xf32, #tpu.memory_space<vmem>>, vector<16x128xf32>
    tpu.vector_store %arg6[%c0_4, %c0_5], %5 {strides = array<i32>} : memref<16x128xf32, #tpu.memory_space<vmem>>, vector<16x128xf32>,
    return
  }
  func.func @transform_0(%arg0: i32, %arg1: i32) -> (i32, i32) {
    %c0_i32 = arith.constant 0 : i32
    %c0_i32_0 = arith.constant 0 : i32
    return %arg0, %c0_i32 : i32, i32
  }
  func.func @transform_1(%arg0: i32, %arg1: i32) -> (i32, i32) {
    %c0_i32 = arith.constant 0 : i32
    %c0_i32_0 = arith.constant 0 : i32
    %c0_i32_1 = arith.constant 0 : i32
    return %c0_i32, %c0_i32_0 : i32, i32
  }
  func.func @transform_2(%arg0: i32, %arg1: i32) -> (i32, i32) {
    %c0_i32 = arith.constant 0 : i32
    %c0_i32_0 = arith.constant 0 : i32
    %c0_i32_1 = arith.constant 0 : i32
    return %c0_i32, %c0_i32_0 : i32, i32
  }
  func.func @transform_3(%arg0: i32, %arg1: i32) -> (i32, i32) {
    %c0_i32 = arith.constant 0 : i32
    %c0_i32_0 = arith.constant 0 : i32
    return %c0_i32, %arg1 : i32, i32
  }
  func.func @transform_4(%arg0: i32, %arg1: i32) -> (i32, i32) {
    %c0_i32 = arith.constant 0 : i32
    return %arg0, %arg1 : i32, i32
  }
}

</mosaic_0001>

<llo_original>
// kernel: gpt_forward.13
$region0: #{gpt_forward.13}
  #allocation0 [shape = 'u32[]', space=smem, size = 0x4, offset = 0x4, fixed_abs, tag = 'smem constant byte address 0x4 - core index']
  #allocation1 [shape = 'u32[144,128]{1,0:T(1,128)}', space=vmem, size = 0x12000, scoped, tag = 'internal scratch']
  #allocation2 [shape = 'bf16[16,32]{1,0:T(8,128)(2,1)}', space=vmem, size = 0x1000, scoped, tag = 'scratch operand']
  %s0 = inlined_call_operand.vmem [shape: f32[16,32], index: 0, kind: input, shape index: {}]
  %s1 = inlined_call_operand.vmem [shape: f32[1,32], index: 1, kind: input, shape index: {}]
  %s2 = inlined_call_operand.vmem [shape: f32[1,32], index: 2, kind: input, shape index: {}]
  %s3 = inlined_call_operand.vmem [shape: bf16[32,128], index: 3, kind: input, shape index: {}]
  %s4 = inlined_call_operand.hbm [shape: f32[16,128], index: 4, kind: output, shape index: {}]
  %s5 = sld [smem:[#allocation0]]
  $region30: #{gpt_forward.13} parent=0
    _
  %s7 = ssub.s32 1, %s5
  %s8 = scalar_select 0, %s7, %s5
  $region1: #{gpt_forward.13} parent=0
    #allocation3 [shape = 'u8[8192]{0}', space=vmem, size = 0x2000, scoped, tag = 'output window, operand 0, single buffered']
    #allocation4 [shape = 's32[1]{0}', space=sflag, size = 0x4, scoped, tag = 'scoped memory for gpt_forward.13']
    %9 = vsyncpa [#allocation4], 0
    // Predicated region
    $region2: #{gpt_forward.13} parent=1 // pred_check
      _
    $region3: #{gpt_forward.13} parent=1 // pred_check_branch
      %11 = sbr.rel (0) target = $region5
    $region4: #{gpt_forward.13} parent=1 // pred_region
      _
    $region5: #{gpt_forward.13} parent=1 // pred_fallthru
      _
    // Predicated region
    $region6: #{gpt_forward.13} parent=1 // pred_check
      _
    $region7: #{gpt_forward.13} parent=1 // pred_check_branch
      %13 = sbr.rel (0) target = $region9
    $region8: #{gpt_forward.13} parent=1 // pred_region
      _
    $region9: #{gpt_forward.13} parent=1 // pred_fallthru
      _
    // Predicated region
    $region10: #{gpt_forward.13} parent=1 // pred_check
      _
    $region11: #{gpt_forward.13} parent=1 // pred_check_branch
      %15 = sbr.rel (0) target = $region13
    $region12: #{gpt_forward.13} parent=1 // pred_region
      _
    $region13: #{gpt_forward.13} parent=1 // pred_fallthru
      _
    // Predicated region
    $region14: #{gpt_forward.13} parent=1 // pred_check
      _
    $region15: #{gpt_forward.13} parent=1 // pred_check_branch
      %17 = sbr.rel (0) target = $region17
    $region16: #{gpt_forward.13} parent=1 // pred_region
      _
    $region17: #{gpt_forward.13} parent=1 // pred_fallthru
      _
    %p19 = scmp.eq.s32.totalorder 0, 0
    // Predicated region
    $region18: #{gpt_forward.13} parent=1 // pred_check
      %p20 = pneg %p19
    $region19: #{gpt_forward.13} parent=1 // pred_check_branch
      %22 = sbr.rel (%p20) target = $region21
    $region20: #{gpt_forward.13} parent=1 // pred_region
      %v23 = vld [vmem:[%s0] sm:$0xff]
      %v24 = vld [vmem:[%s0 + $0x8] sm:$0xff]
      %v25 = vld [vmem:[%s1] sm:$0x1]
      %v26 = vld [vmem:[%s2] sm:$0x1]
      %vm27 = vcmask 261120
      %v28 = vsel %vm27, %v23, 0.0
      %29 = vadd.xlane.f32.xlu0 %v28
      %v30 = vpop.xlane.xlu0 %29
      %v31 = vsel %vm27, %v24, 0.0
      %32 = vadd.xlane.f32.xlu0 %v31
      %v33 = vpop.xlane.xlu0 %32
      %v34 = vrcp.pop 32.0
      %v35 = vmul.f32 %v30, %v34
      %v36 = vmul.f32 %v33, %v34
      %v37 = vsub.f32 %v23, %v35
      %v38 = vsub.f32 %v24, %v36
      %v39 = vmul.f32 %v37, %v37
      %v40 = vmul.f32 %v38, %v38
      %v41 = vsel %vm27, %v39, 0.0
      %42 = vadd.xlane.f32.xlu0 %v41
      %v43 = vpop.xlane.xlu0 %42
      %v44 = vsel %vm27, %v40, 0.0
      %45 = vadd.xlane.f32.xlu0 %v44
      %v46 = vpop.xlane.xlu0 %45
      %v47 = vmul.f32 %v43, %v34
      %v48 = vmul.f32 %v46, %v34
      %v49 = vadd.f32 %v47, 1e-05
      %v50 = vadd.f32 %v48, 1e-05
      %v51 = vrsqrt.pop %v49
      %v52 = vrsqrt.pop %v50
      %v53 = vmul.f32 %v37, %v51
      %v54 = vmul.f32 %v38, %v52
      %v56 = vlaneseq
      %v57 = vshrl.u32 %v56, 7
      %v58 = vsub.s32 0, %v57
      %v59 = vrot.slane %v25, %v58
      %v61 = vmul.f32 %v59, %v53
      %v62 = vmul.f32 %v59, %v54
      %v64 = vlaneseq
      %v65 = vshrl.u32 %v64, 7
      %v66 = vsub.s32 0, %v65
      %v67 = vrot.slane %v26, %v66
      %v69 = vadd.f32 %v61, %v67
      %v70 = vadd.f32 %v62, %v67
      %v71 = vpack.c.bf16 %v70, %v69
      %v73 = vunpack.c.l.b16 %v71
      %v74 = vunpack.c.h.b16 %v71
      %v75 = vpack.c.b16 %v73, %v73
      %v76 = vpack.c.b16 %v74, %v74
      %vm79 = vcmask 257024
      %80 = vst.msk [vmem:[#allocation2] sm:$0xf] %vm79, %v75
      %81 = vst.msk [vmem:[#allocation2 + $0x4] sm:$0xf] %vm79, %v76
    $region21: #{gpt_forward.13} parent=1 // pred_fallthru
      _
    %v82 = vld [vmem:[#allocation2] sm:$0xf]
    %v83 = vld [vmem:[#allocation2 + $0x4] sm:$0xf]
    %v84 = vld [vmem:[%s3] sm:$0xf]
    %v85 = vld [vmem:[%s3 + $0x4] sm:$0xf]
    %v86 = vld [vmem:[%s3 + $0x8] sm:$0xf]
    %v87 = vld [vmem:[%s3 + $0xc] sm:$0xf]
    %v90 = vunpack.c.l.b16 %v82
    %v91 = vunpack.c.l.b16 %v83
    %v92 = vpack.c.b16 %v91, %v90
    %v97 = vunpack.c.l.b16 %v84
    %v98 = vunpack.c.l.b16 %v85
    %v99 = vunpack.c.l.b16 %v86
    %v100 = vunpack.c.l.b16 %v87
    %v101 = vpack.c.b16 %v98, %v97
    %v102 = vpack.c.b16 %v100, %v99
    %vm105 = vcmask 261120
    %v107 = vsel %vm105, %v92, 0
    %109 = vmatprep.subr.bf16.mxu0 0
    %110 = vmatpush1.bf16.msra.mxu0 0
    %111 = vmatprep.subr.bf16.mxu0 0
    %112 = vmatpush1.bf16.msra.mxu0 0
    %113 = vmatprep.subr.bf16.mxu0 0
    %114 = vmatpush1.bf16.msra.mxu0 0
    %115 = vmatprep.subr.bf16.mxu0 0
    %116 = vmatpush1.bf16.msra.mxu0 0
    %117 = vmatprep.subr.bf16.mxu0 0
    %118 = vmatpush1.bf16.msra.mxu0 0
    %119 = vmatprep.subr.bf16.mxu0 0
    %120 = vmatpush1.bf16.msra.mxu0 0
    %121 = vmatprep.subr.bf16.mxu0 0
    %122 = vmatpush1.bf16.msra.mxu0 %v102
    %123 = vmatprep.subr.bf16.mxu0 0
    %124 = vmatpush1.bf16.msra.mxu0 %v101
    %125 = vmatprep.subr.bf16.mxu0 0
    %126 = vmatpush2.bf16.msra.mxu0 0
    %127 = vmatprep.subr.bf16.mxu0 0
    %128 = vmatpush2.bf16.msra.mxu0 0
    %129 = vmatprep.subr.bf16.mxu0 0
    %130 = vmatpush2.bf16.msra.mxu0 0
    %131 = vmatprep.subr.bf16.mxu0 0
    %132 = vmatpush2.bf16.msra.mxu0 0
    %133 = vmatprep.subr.bf16.mxu0 0
    %134 = vmatpush2.bf16.msra.mxu0 0
    %135 = vmatprep.subr.bf16.mxu0 0
    %136 = vmatpush2.bf16.msra.mxu0 0
    %137 = vmatprep.subr.bf16.mxu0 0
    %138 = vmatpush2.bf16.msra.mxu0 0
    %139 = vmatprep.subr.bf16.mxu0 0
    %140 = vmatpush2.bf16.msra.mxu0 0
    %141 = vmatprep.mubr.bf16.mxu0 0
    %142 = vmatmul.mubr.bf16.gmra.mxu0 %v107
    %v143 = vpop.f32.mrf.mxu0
    %v144 = vadd.f32 0.0, %v143
    %v145 = vpop.f32.mrf.mxu0
    %v146 = vpop.f32.mrf.mxu0
    %v147 = vadd.f32 0.0, %v146
    %v148 = vpop.f32.mrf.mxu0
    %149 = vdwg.mxu0
    %150 = vst [vmem:[#allocation3] sm:$0xff] %v144
    %151 = vst [vmem:[#allocation3 + $0x8] sm:$0xff] %v147
    // Predicated region
    $region22: #{gpt_forward.13} parent=1 // pred_check
      _
    $region23: #{gpt_forward.13} parent=1 // pred_check_branch
      %153 = sbr.rel (0) target = $region25
    $region24: #{gpt_forward.13} parent=1 // pred_region
      %s155 = ssub.s32 256, 256
      %156 = vsyncadd [#allocation4], %s155
      %s157 = sshll.u32 [#allocation3], 4
      %s158 = int_to_ptr.vmem [resolvable:$true] %s157
      %163 = dma.vmem_to_hbm [thread:$0]  %s158, 256, %s4, [#allocation4], 128, 128, 8
    $region25: #{gpt_forward.13} parent=1 // pred_fallthru
      _
    // Predicated region
    $region26: #{gpt_forward.13} parent=1 // pred_check
      _
    $region27: #{gpt_forward.13} parent=1 // pred_check_branch
      %165 = sbr.rel (0) target = $region29
    $region28: #{gpt_forward.13} parent=1 // pred_region
      %166 = dma.done [#allocation4], 256
    $region29: #{gpt_forward.13} parent=1 // pred_fallthru
      _
    %167 = vsyncpa [#allocation4], 1

// kernel: gpt_forward.7
$region0: #{gpt_forward.7}
  #allocation0 [shape = 'u32[]', space=smem, size = 0x4, offset = 0x4, fixed_abs, tag = 'smem constant byte address 0x4 - core index']
  #allocation1 [shape = 'u32[144,128]{1,0:T(1,128)}', space=vmem, size = 0x12000, scoped, tag = 'internal scratch']
  %s0 = inlined_call_operand.vmem [shape: f32[16,32], index: 0, kind: input, shape index: {}]
  %s1 = inlined_call_operand.vmem [shape: f32[1,32], index: 1, kind: input, shape index: {}]
  %s2 = inlined_call_operand.vmem [shape: f32[1,32], index: 2, kind: input, shape index: {}]
  %s3 = inlined_call_operand.vmem [shape: bf16[32,96], index: 3, kind: input, shape index: {}]
  %s4 = inlined_call_operand.vmem [shape: bf16[16,32], index: 4, kind: output, shape index: {0}]
  %s5 = inlined_call_operand.vmem [shape: bf16[16,32], index: 5, kind: output, shape index: {1}]
  %s6 = inlined_call_operand.vmem [shape: bf16[16,32], index: 6, kind: output, shape index: {2}]
  %7 = xla_tuple %s4, %s5, %s6
  %s8 = sld [smem:[#allocation0]]
  $region42: #{gpt_forward.7} parent=0
    _
  %s10 = ssub.s32 1, %s8
  %s11 = scalar_select 0, %s10, %s8
  // Predicated region
  $region2: #{gpt_forward.7} parent=0 // pred_check
    _
  $region3: #{gpt_forward.7} parent=0 // pred_check_branch
    %13 = sbr.rel (0) target = $region5
  $region4: #{gpt_forward.7} parent=0 // pred_region
    _
  $region5: #{gpt_forward.7} parent=0 // pred_fallthru
    _
  // Predicated region
  $region6: #{gpt_forward.7} parent=0 // pred_check
    _
  $region7: #{gpt_forward.7} parent=0 // pred_check_branch
    %15 = sbr.rel (0) target = $region9
  $region8: #{gpt_forward.7} parent=0 // pred_region
    _
  $region9: #{gpt_forward.7} parent=0 // pred_fallthru
    _
  // Predicated region
  $region10: #{gpt_forward.7} parent=0 // pred_check
    _
  $region11: #{gpt_forward.7} parent=0 // pred_check_branch
    %17 = sbr.rel (0) target = $region13
  $region12: #{gpt_forward.7} parent=0 // pred_region
    _
  $region13: #{gpt_forward.7} parent=0 // pred_fallthru
    _
  // Predicated region
  $region14: #{gpt_forward.7} parent=0 // pred_check
    _
  $region15: #{gpt_forward.7} parent=0 // pred_check_branch
    %19 = sbr.rel (0) target = $region17
  $region16: #{gpt_forward.7} parent=0 // pred_region
    _
  $region17: #{gpt_forward.7} parent=0 // pred_fallthru
    _
  %v21 = vld [vmem:[%s0] sm:$0xff]
  %v22 = vld [vmem:[%s0 + $0x8] sm:$0xff]
  %v23 = vld [vmem:[%s1] sm:$0x1]
  %v24 = vld [vmem:[%s2] sm:$0x1]
  %vm25 = vcmask 261120
  %v26 = vsel %vm25, %v21, 0.0
  %27 = vadd.xlane.f32.xlu0 %v26
  %v28 = vpop.xlane.xlu0 %27
  %v29 = vsel %vm25, %v22, 0.0
  %30 = vadd.xlane.f32.xlu0 %v29
  %v31 = vpop.xlane.xlu0 %30
  %v32 = vrcp.pop 32.0
  %v33 = vmul.f32 %v28, %v32
  %v34 = vmul.f32 %v31, %v32
  %v35 = vsub.f32 %v21, %v33
  %v36 = vsub.f32 %v22, %v34
  %v37 = vmul.f32 %v35, %v35
  %v38 = vmul.f32 %v36, %v36
  %v39 = vsel %vm25, %v37, 0.0
  %40 = vadd.xlane.f32.xlu0 %v39
  %v41 = vpop.xlane.xlu0 %40
  %v42 = vsel %vm25, %v38, 0.0
  %43 = vadd.xlane.f32.xlu0 %v42
  %v44 = vpop.xlane.xlu0 %43
  %v45 = vmul.f32 %v41, %v32
  %v46 = vmul.f32 %v44, %v32
  %v47 = vadd.f32 %v45, 1e-05
  %v48 = vadd.f32 %v46, 1e-05
  %v49 = vrsqrt.pop %v47
  %v50 = vrsqrt.pop %v48
  %v51 = vmul.f32 %v35, %v49
  %v52 = vmul.f32 %v36, %v50
  %v54 = vlaneseq
  %v55 = vshrl.u32 %v54, 7
  %v56 = vsub.s32 0, %v55
  %v57 = vrot.slane %v23, %v56
  %v59 = vmul.f32 %v57, %v51
  %v60 = vmul.f32 %v57, %v52
  %v62 = vlaneseq
  %v63 = vshrl.u32 %v62, 7
  %v64 = vsub.s32 0, %v63
  %v65 = vrot.slane %v24, %v64
  %v67 = vadd.f32 %v59, %v65
  %v68 = vadd.f32 %v60, %v65
  %v69 = vpack.c.bf16 %v68, %v67
  %v70 = vld [vmem:[%s3] sm:$0xf]
  %v71 = vld [vmem:[%s3 + $0x4] sm:$0xf]
  %v72 = vld [vmem:[%s3 + $0x8] sm:$0xf]
  %v73 = vld [vmem:[%s3 + $0xc] sm:$0xf]
  %v78 = vunpack.c.l.b16 %v70
  %v79 = vunpack.c.l.b16 %v71
  %v80 = vunpack.c.l.b16 %v72
  %v81 = vunpack.c.l.b16 %v73
  %v82 = vpack.c.b16 %v79, %v78
  %v83 = vpack.c.b16 %v81, %v80
  %v87 = vsel %vm25, %v69, 0
  %89 = vmatprep.subr.bf16.mxu0 0
  %90 = vmatpush1.bf16.msra.mxu0 0
  %91 = vmatprep.subr.bf16.mxu0 0
  %92 = vmatpush1.bf16.msra.mxu0 0
  %93 = vmatprep.subr.bf16.mxu0 0
  %94 = vmatpush1.bf16.msra.mxu0 0
  %95 = vmatprep.subr.bf16.mxu0 0
  %96 = vmatpush1.bf16.msra.mxu0 0
  %97 = vmatprep.subr.bf16.mxu0 0
  %98 = vmatpush1.bf16.msra.mxu0 0
  %99 = vmatprep.subr.bf16.mxu0 0
  %100 = vmatpush1.bf16.msra.mxu0 0
  %101 = vmatprep.subr.bf16.mxu0 0
  %102 = vmatpush1.bf16.msra.mxu0 %v83
  %103 = vmatprep.subr.bf16.mxu0 0
  %104 = vmatpush1.bf16.msra.mxu0 %v82
  %105 = vmatprep.subr.bf16.mxu0 0
  %106 = vmatpush2.bf16.msra.mxu0 0
  %107 = vmatprep.subr.bf16.mxu0 0
  %108 = vmatpush2.bf16.msra.mxu0 0
  %109 = vmatprep.subr.bf16.mxu0 0
  %110 = vmatpush2.bf16.msra.mxu0 0
  %111 = vmatprep.subr.bf16.mxu0 0
  %112 = vmatpush2.bf16.msra.mxu0 0
  %113 = vmatprep.subr.bf16.mxu0 0
  %114 = vmatpush2.bf16.msra.mxu0 0
  %115 = vmatprep.subr.bf16.mxu0 0
  %116 = vmatpush2.bf16.msra.mxu0 0
  %117 = vmatprep.subr.bf16.mxu0 0
  %118 = vmatpush2.bf16.msra.mxu0 0
  %119 = vmatprep.subr.bf16.mxu0 0
  %120 = vmatpush2.bf16.msra.mxu0 0
  %121 = vmatprep.mubr.bf16.mxu0 0
  %122 = vmatmul.mubr.bf16.gmra.mxu0 %v87
  %v123 = vpop.f32.mrf.mxu0
  %v124 = vadd.f32 0.0, %v123
  %v125 = vpop.f32.mrf.mxu0
  %v126 = vpop.f32.mrf.mxu0
  %v127 = vadd.f32 0.0, %v126
  %v128 = vpop.f32.mrf.mxu0
  %129 = vdwg.mxu0
  %v130 = vpack.c.bf16 %v127, %v124
  %v132 = vunpack.c.l.b16 %v130
  %v133 = vunpack.c.h.b16 %v130
  %v134 = vpack.c.b16 %v132, %v132
  %v135 = vpack.c.b16 %v133, %v133
  %vm138 = vcmask 257024
  %139 = vst.msk [vmem:[%s4] sm:$0xf] %vm138, %v134
  %140 = vst.msk [vmem:[%s4 + $0x4] sm:$0xf] %vm138, %v135
  %141 = vrot.lane.b32.xlu0 %v134, 96
  %v142 = vpop.permute.xlu0 %141
  %143 = vrot.lane.b32.xlu0 %v135, 96
  %v144 = vpop.permute.xlu0 %143
  %147 = vst.msk [vmem:[%s5] sm:$0xf] %vm138, %v142
  %148 = vst.msk [vmem:[%s5 + $0x4] sm:$0xf] %vm138, %v144
  %149 = vrot.lane.b32.xlu0 %v134, 64
  %v150 = vpop.permute.xlu0 %149
  %151 = vrot.lane.b32.xlu0 %v135, 64
  %v152 = vpop.permute.xlu0 %151
  %155 = vst.msk [vmem:[%s6] sm:$0xf] %vm138, %v150
  %156 = vst.msk [vmem:[%s6 + $0x4] sm:$0xf] %vm138, %v152
  // Predicated region
  $region18: #{gpt_forward.7} parent=0 // pred_check
    _
  $region19: #{gpt_forward.7} parent=0 // pred_check_branch
    %158 = sbr.rel (0) target = $region21
  $region20: #{gpt_forward.7} parent=0 // pred_region
    _
  $region21: #{gpt_forward.7} parent=0 // pred_fallthru
    _
  // Predicated region
  $region22: #{gpt_forward.7} parent=0 // pred_check
    _
  $region23: #{gpt_forward.7} parent=0 // pred_check_branch
    %160 = sbr.rel (0) target = $region25
  $region24: #{gpt_forward.7} parent=0 // pred_region
    _
  $region25: #{gpt_forward.7} parent=0 // pred_fallthru
    _
  // Predicated region
  $region26: #{gpt_forward.7} parent=0 // pred_check
    _
  $region27: #{gpt_forward.7} parent=0 // pred_check_branch
    %162 = sbr.rel (0) target = $region29
  $region28: #{gpt_forward.7} parent=0 // pred_region
    _
  $region29: #{gpt_forward.7} parent=0 // pred_fallthru
    _
  // Predicated region
  $region30: #{gpt_forward.7} parent=0 // pred_check
    _
  $region31: #{gpt_forward.7} parent=0 // pred_check_branch
    %164 = sbr.rel (0) target = $region33
  $region32: #{gpt_forward.7} parent=0 // pred_region
    _
  $region33: #{gpt_forward.7} parent=0 // pred_fallthru
    _
  // Predicated region
  $region34: #{gpt_forward.7} parent=0 // pred_check
    _
  $region35: #{gpt_forward.7} parent=0 // pred_check_branch
    %166 = sbr.rel (0) target = $region37
  $region36: #{gpt_forward.7} parent=0 // pred_region
    _
  $region37: #{gpt_forward.7} parent=0 // pred_fallthru
    _
  // Predicated region
  $region38: #{gpt_forward.7} parent=0 // pred_check
    _
  $region39: #{gpt_forward.7} parent=0 // pred_check_branch
    %168 = sbr.rel (0) target = $region41
  $region40: #{gpt_forward.7} parent=0 // pred_region
    _
  $region41: #{gpt_forward.7} parent=0 // pred_fallthru
    _

// kernel: gpt_forward.9
$region0: #{gpt_forward.9}
  #allocation0 [shape = 'u32[]', space=smem, size = 0x4, offset = 0x4, fixed_abs, tag = 'smem constant byte address 0x4 - core index']
  #allocation1 [shape = 'u32[144,128]{1,0:T(1,128)}', space=vmem, size = 0x12000, scoped, tag = 'internal scratch']
  #allocation2 [shape = 'bf16[16,32]{1,0:T(8,128)(2,1)}', space=vmem, size = 0x1000, scoped, tag = 'scratch operand']
  #allocation3 [shape = 'f32[16,32]{1,0:T(8,128)}', space=vmem, size = 0x2000, scoped, tag = 'scratch operand']
  %s0 = inlined_call_operand.vmem [shape: f32[16,32], index: 0, kind: input, shape index: {}]
  %s1 = inlined_call_operand.vmem [shape: f32[1,32], index: 1, kind: input, shape index: {}]
  %s2 = inlined_call_operand.vmem [shape: f32[1,32], index: 2, kind: input, shape index: {}]
  %s3 = inlined_call_operand.vmem [shape: bf16[32,128], index: 3, kind: input, shape index: {}]
  %s4 = inlined_call_operand.vmem [shape: f32[1,128], index: 4, kind: input, shape index: {}]
  %s5 = inlined_call_operand.vmem [shape: bf16[128,32], index: 5, kind: input, shape index: {}]
  %s6 = inlined_call_operand.vmem [shape: f32[1,32], index: 6, kind: input, shape index: {}]
  %s7 = inlined_call_operand.vmem [shape: f32[16,32], index: 7, kind: output, shape index: {}]
  %s8 = sld [smem:[#allocation0]]
  $region46: #{gpt_forward.9} parent=0
    _
  %s10 = ssub.s32 1, %s8
  %s11 = scalar_select 0, %s10, %s8
  // Predicated region
  $region2: #{gpt_forward.9} parent=0 // pred_check
    _
  $region3: #{gpt_forward.9} parent=0 // pred_check_branch
    %13 = sbr.rel (0) target = $region5
  $region4: #{gpt_forward.9} parent=0 // pred_region
    _
  $region5: #{gpt_forward.9} parent=0 // pred_fallthru
    _
  // Predicated region
  $region6: #{gpt_forward.9} parent=0 // pred_check
    _
  $region7: #{gpt_forward.9} parent=0 // pred_check_branch
    %15 = sbr.rel (0) target = $region9
  $region8: #{gpt_forward.9} parent=0 // pred_region
    _
  $region9: #{gpt_forward.9} parent=0 // pred_fallthru
    _
  // Predicated region
  $region10: #{gpt_forward.9} parent=0 // pred_check
    _
  $region11: #{gpt_forward.9} parent=0 // pred_check_branch
    %17 = sbr.rel (0) target = $region13
  $region12: #{gpt_forward.9} parent=0 // pred_region
    _
  $region13: #{gpt_forward.9} parent=0 // pred_fallthru
    _
  // Predicated region
  $region14: #{gpt_forward.9} parent=0 // pred_check
    _
  $region15: #{gpt_forward.9} parent=0 // pred_check_branch
    %19 = sbr.rel (0) target = $region17
  $region16: #{gpt_forward.9} parent=0 // pred_region
    _
  $region17: #{gpt_forward.9} parent=0 // pred_fallthru
    _
  // Predicated region
  $region18: #{gpt_forward.9} parent=0 // pred_check
    _
  $region19: #{gpt_forward.9} parent=0 // pred_check_branch
    %21 = sbr.rel (0) target = $region21
  $region20: #{gpt_forward.9} parent=0 // pred_region
    _
  $region21: #{gpt_forward.9} parent=0 // pred_fallthru
    _
  // Predicated region
  $region22: #{gpt_forward.9} parent=0 // pred_check
    _
  $region23: #{gpt_forward.9} parent=0 // pred_check_branch
    %23 = sbr.rel (0) target = $region25
  $region24: #{gpt_forward.9} parent=0 // pred_region
    _
  $region25: #{gpt_forward.9} parent=0 // pred_fallthru
    _
  // Predicated region
  $region26: #{gpt_forward.9} parent=0 // pred_check
    _
  $region27: #{gpt_forward.9} parent=0 // pred_check_branch
    %25 = sbr.rel (0) target = $region29
  $region28: #{gpt_forward.9} parent=0 // pred_region
    _
  $region29: #{gpt_forward.9} parent=0 // pred_fallthru
    _
  %p27 = scmp.eq.s32.totalorder 0, 0
  // Predicated region
  $region30: #{gpt_forward.9} parent=0 // pred_check
    %p28 = pneg %p27
  $region31: #{gpt_forward.9} parent=0 // pred_check_branch
    %30 = sbr.rel (%p28) target = $region33
  $region32: #{gpt_forward.9} parent=0 // pred_region
    %v31 = vld [vmem:[%s0] sm:$0xff]
    %v32 = vld [vmem:[%s0 + $0x8] sm:$0xff]
    %v33 = vld [vmem:[%s1] sm:$0x1]
    %v34 = vld [vmem:[%s2] sm:$0x1]
    %vm35 = vcmask 261120
    %v36 = vsel %vm35, %v31, 0.0
    %37 = vadd.xlane.f32.xlu0 %v36
    %v38 = vpop.xlane.xlu0 %37
    %v39 = vsel %vm35, %v32, 0.0
    %40 = vadd.xlane.f32.xlu0 %v39
    %v41 = vpop.xlane.xlu0 %40
    %v42 = vrcp.pop 32.0
    %v43 = vmul.f32 %v38, %v42
    %v44 = vmul.f32 %v41, %v42
    %v45 = vsub.f32 %v31, %v43
    %v46 = vsub.f32 %v32, %v44
    %v47 = vmul.f32 %v45, %v45
    %v48 = vmul.f32 %v46, %v46
    %v49 = vsel %vm35, %v47, 0.0
    %50 = vadd.xlane.f32.xlu0 %v49
    %v51 = vpop.xlane.xlu0 %50
    %v52 = vsel %vm35, %v48, 0.0
    %53 = vadd.xlane.f32.xlu0 %v52
    %v54 = vpop.xlane.xlu0 %53
    %v55 = vmul.f32 %v51, %v42
    %v56 = vmul.f32 %v54, %v42
    %v57 = vadd.f32 %v55, 1e-05
    %v58 = vadd.f32 %v56, 1e-05
    %v59 = vrsqrt.pop %v57
    %v60 = vrsqrt.pop %v58
    %v61 = vmul.f32 %v45, %v59
    %v62 = vmul.f32 %v46, %v60
    %v64 = vlaneseq
    %v65 = vshrl.u32 %v64, 7
    %v66 = vsub.s32 0, %v65
    %v67 = vrot.slane %v33, %v66
    %v69 = vmul.f32 %v67, %v61
    %v70 = vmul.f32 %v67, %v62
    %v72 = vlaneseq
    %v73 = vshrl.u32 %v72, 7
    %v74 = vsub.s32 0, %v73
    %v75 = vrot.slane %v34, %v74
    %v77 = vadd.f32 %v69, %v75
    %v78 = vadd.f32 %v70, %v75
    %v79 = vpack.c.bf16 %v78, %v77
    %v81 = vunpack.c.l.b16 %v79
    %v82 = vunpack.c.h.b16 %v79
    %v83 = vpack.c.b16 %v81, %v81
    %v84 = vpack.c.b16 %v82, %v82
    %vm87 = vcmask 257024
    %88 = vst.msk [vmem:[#allocation2] sm:$0xf] %vm87, %v83
    %89 = vst.msk [vmem:[#allocation2 + $0x4] sm:$0xf] %vm87, %v84
    %90 = vst.msk [vmem:[#allocation3] sm:$0xff] %vm35, 0.0
    %91 = vst.msk [vmem:[#allocation3 + $0x8] sm:$0xff] %vm35, 0.0
  $region33: #{gpt_forward.9} parent=0 // pred_fallthru
    _
  %v92 = vld [vmem:[#allocation2] sm:$0xf]
  %v93 = vld [vmem:[#allocation2 + $0x4] sm:$0xf]
  %v94 = vld [vmem:[%s3] sm:$0xf]
  %v95 = vld [vmem:[%s3 + $0x4] sm:$0xf]
  %v96 = vld [vmem:[%s3 + $0x8] sm:$0xf]
  %v97 = vld [vmem:[%s3 + $0xc] sm:$0xf]
  %v98 = vld [vmem:[%s4] sm:$0x1]
  %v100 = vlaneseq
  %v101 = vshrl.u32 %v100, 7
  %v102 = vsub.s32 0, %v101
  %v103 = vrot.slane %v98, %v102
  %v107 = vunpack.c.l.b16 %v92
  %v108 = vunpack.c.l.b16 %v93
  %v109 = vpack.c.b16 %v108, %v107
  %v114 = vunpack.c.l.b16 %v94
  %v115 = vunpack.c.l.b16 %v95
  %v116 = vunpack.c.l.b16 %v96
  %v117 = vunpack.c.l.b16 %v97
  %v118 = vpack.c.b16 %v115, %v114
  %v119 = vpack.c.b16 %v117, %v116
  %vm122 = vcmask 261120
  %v124 = vsel %vm122, %v109, 0
  %126 = vmatprep.subr.bf16.mxu0 0
  %127 = vmatpush1.bf16.msra.mxu0 0
  %128 = vmatprep.subr.bf16.mxu0 0
  %129 = vmatpush1.bf16.msra.mxu0 0
  %130 = vmatprep.subr.bf16.mxu0 0
  %131 = vmatpush1.bf16.msra.mxu0 0
  %132 = vmatprep.subr.bf16.mxu0 0
  %133 = vmatpush1.bf16.msra.mxu0 0
  %134 = vmatprep.subr.bf16.mxu0 0
  %135 = vmatpush1.bf16.msra.mxu0 0
  %136 = vmatprep.subr.bf16.mxu0 0
  %137 = vmatpush1.bf16.msra.mxu0 0
  %138 = vmatprep.subr.bf16.mxu0 0
  %139 = vmatpush1.bf16.msra.mxu0 %v119
  %140 = vmatprep.subr.bf16.mxu0 0
  %141 = vmatpush1.bf16.msra.mxu0 %v118
  %142 = vmatprep.subr.bf16.mxu0 0
  %143 = vmatpush2.bf16.msra.mxu0 0
  %144 = vmatprep.subr.bf16.mxu0 0
  %145 = vmatpush2.bf16.msra.mxu0 0
  %146 = vmatprep.subr.bf16.mxu0 0
  %147 = vmatpush2.bf16.msra.mxu0 0
  %148 = vmatprep.subr.bf16.mxu0 0
  %149 = vmatpush2.bf16.msra.mxu0 0
  %150 = vmatprep.subr.bf16.mxu0 0
  %151 = vmatpush2.bf16.msra.mxu0 0
  %152 = vmatprep.subr.bf16.mxu0 0
  %153 = vmatpush2.bf16.msra.mxu0 0
  %154 = vmatprep.subr.bf16.mxu0 0
  %155 = vmatpush2.bf16.msra.mxu0 0
  %156 = vmatprep.subr.bf16.mxu0 0
  %157 = vmatpush2.bf16.msra.mxu0 0
  %158 = vmatprep.mubr.bf16.mxu0 0
  %159 = vmatmul.mubr.bf16.gmra.mxu0 %v124
  %v160 = vpop.f32.mrf.mxu0
  %v161 = vadd.f32 %v103, %v160
  %v162 = vpop.f32.mrf.mxu0
  %v163 = vpop.f32.mrf.mxu0
  %v164 = vadd.f32 %v103, %v163
  %v165 = vpop.f32.mrf.mxu0
  %166 = vdwg.mxu0
  %v167 = vmul.f32 %v161, 0.5
  %v168 = vmul.f32 %v164, 0.5
  %v169 = vmul.f32 %v161, 0.044715
  %v170 = vmul.f32 %v164, 0.044715
  %v171 = vmul.f32 %v169, %v161
  %v172 = vmul.f32 %v170, %v164
  %v173 = vmul.f32 %v171, %v161
  %v174 = vmul.f32 %v172, %v164
  %v175 = vadd.f32 %v161, %v173
  %v176 = vadd.f32 %v164, %v174
  %v177 = vmul.f32 %v175, 0.7978846
  %v178 = vmul.f32 %v176, 0.7978846
  %v179 = vtanh.pop %v177
  %v180 = vtanh.pop %v178
  %v181 = vadd.f32 %v179, 1.0
  %v182 = vadd.f32 %v180, 1.0
  %v183 = vmul.f32 %v167, %v181
  %v184 = vmul.f32 %v168, %v182
  %v185 = vld [vmem:[#allocation3] sm:$0xff]
  %v186 = vld [vmem:[#allocation3 + $0x8] sm:$0xff]
  %v187 = vpack.c.bf16 %v184, %v183
  %v188 = vld [vmem:[%s5] sm:$0xf]
  %v189 = vld [vmem:[%s5 + $0x4] sm:$0xf]
  %v190 = vld [vmem:[%s5 + $0x8] sm:$0xf]
  %v191 = vld [vmem:[%s5 + $0xc] sm:$0xf]
  %v192 = vld [vmem:[%s5 + $0x10] sm:$0xf]
  %v193 = vld [vmem:[%s5 + $0x14] sm:$0xf]
  %v194 = vld [vmem:[%s5 + $0x18] sm:$0xf]
  %v195 = vld [vmem:[%s5 + $0x1c] sm:$0xf]
  %v196 = vld [vmem:[%s5 + $0x20] sm:$0xf]
  %v197 = vld [vmem:[%s5 + $0x24] sm:$0xf]
  %v198 = vld [vmem:[%s5 + $0x28] sm:$0xf]
  %v199 = vld [vmem:[%s5 + $0x2c] sm:$0xf]
  %v200 = vld [vmem:[%s5 + $0x30] sm:$0xf]
  %v201 = vld [vmem:[%s5 + $0x34] sm:$0xf]
  %v202 = vld [vmem:[%s5 + $0x38] sm:$0xf]
  %v203 = vld [vmem:[%s5 + $0x3c] sm:$0xf]
  %v220 = vunpack.c.l.b16 %v188
  %v221 = vunpack.c.l.b16 %v189
  %v222 = vunpack.c.l.b16 %v190
  %v223 = vunpack.c.l.b16 %v191
  %v224 = vunpack.c.l.b16 %v192
  %v225 = vunpack.c.l.b16 %v193
  %v226 = vunpack.c.l.b16 %v194
  %v227 = vunpack.c.l.b16 %v195
  %v228 = vunpack.c.l.b16 %v196
  %v229 = vunpack.c.l.b16 %v197
  %v230 = vunpack.c.l.b16 %v198
  %v231 = vunpack.c.l.b16 %v199
  %v232 = vunpack.c.l.b16 %v200
  %v233 = vunpack.c.l.b16 %v201
  %v234 = vunpack.c.l.b16 %v202
  %v235 = vunpack.c.l.b16 %v203
  %v236 = vpack.c.b16 %v221, %v220
  %v237 = vpack.c.b16 %v223, %v222
  %v238 = vpack.c.b16 %v225, %v224
  %v239 = vpack.c.b16 %v227, %v226
  %v240 = vpack.c.b16 %v229, %v228
  %v241 = vpack.c.b16 %v231, %v230
  %v242 = vpack.c.b16 %v233, %v232
  %v243 = vpack.c.b16 %v235, %v234
  %252 = vmatprep.subr.bf16.mxu0 0
  %253 = vmatpush1.bf16.msra.mxu0 %v243
  %254 = vmatprep.subr.bf16.mxu0 0
  %255 = vmatpush1.bf16.msra.mxu0 %v242
  %256 = vmatprep.subr.bf16.mxu0 0
  %257 = vmatpush1.bf16.msra.mxu0 %v241
  %258 = vmatprep.subr.bf16.mxu0 0
  %259 = vmatpush1.bf16.msra.mxu0 %v240
  %260 = vmatprep.subr.bf16.mxu0 0
  %261 = vmatpush1.bf16.msra.mxu0 %v239
  %262 = vmatprep.subr.bf16.mxu0 0
  %263 = vmatpush1.bf16.msra.mxu0 %v238
  %264 = vmatprep.subr.bf16.mxu0 0
  %265 = vmatpush1.bf16.msra.mxu0 %v237
  %266 = vmatprep.subr.bf16.mxu0 0
  %267 = vmatpush1.bf16.msra.mxu0 %v236
  %268 = vmatprep.subr.bf16.mxu0 0
  %269 = vmatpush2.bf16.msra.mxu0 0
  %270 = vmatprep.subr.bf16.mxu0 0
  %271 = vmatpush2.bf16.msra.mxu0 0
  %272 = vmatprep.subr.bf16.mxu0 0
  %273 = vmatpush2.bf16.msra.mxu0 0
  %274 = vmatprep.subr.bf16.mxu0 0
  %275 = vmatpush2.bf16.msra.mxu0 0
  %276 = vmatprep.subr.bf16.mxu0 0
  %277 = vmatpush2.bf16.msra.mxu0 0
  %278 = vmatprep.subr.bf16.mxu0 0
  %279 = vmatpush2.bf16.msra.mxu0 0
  %280 = vmatprep.subr.bf16.mxu0 0
  %281 = vmatpush2.bf16.msra.mxu0 0
  %282 = vmatprep.subr.bf16.mxu0 0
  %283 = vmatpush2.bf16.msra.mxu0 0
  %284 = vmatprep.mubr.bf16.mxu0 0
  %285 = vmatmul.mubr.bf16.gmra.mxu0 %v187
  %v286 = vpop.f32.mrf.mxu0
  %v287 = vadd.f32 0.0, %v286
  %v288 = vpop.f32.mrf.mxu0
  %v289 = vpop.f32.mrf.mxu0
  %v290 = vadd.f32 0.0, %v289
  %v291 = vpop.f32.mrf.mxu0
  %292 = vdwg.mxu0
  %v293 = vadd.f32 %v185, %v287
  %v294 = vadd.f32 %v186, %v290
  %295 = vst.msk [vmem:[#allocation3] sm:$0xff] %vm122, %v293
  %296 = vst.msk [vmem:[#allocation3 + $0x8] sm:$0xff] %vm122, %v294
  // Predicated region
  $region34: #{gpt_forward.9} parent=0 // pred_check
    %p297 = pneg %p27
  $region35: #{gpt_forward.9} parent=0 // pred_check_branch
    %299 = sbr.rel (%p297) target = $region37
  $region36: #{gpt_forward.9} parent=0 // pred_region
    %v300 = vld [vmem:[%s0] sm:$0xff]
    %v301 = vld [vmem:[%s0 + $0x8] sm:$0xff]
    %v302 = vld [vmem:[#allocation3] sm:$0xff]
    %v303 = vld [vmem:[#allocation3 + $0x8] sm:$0xff]
    %v304 = vadd.f32 %v300, %v302
    %v305 = vadd.f32 %v301, %v303
    %v306 = vld [vmem:[%s6] sm:$0x1]
    %v308 = vlaneseq
    %v309 = vshrl.u32 %v308, 7
    %v310 = vsub.s32 0, %v309
    %v311 = vrot.slane %v306, %v310
    %v313 = vadd.f32 %v304, %v311
    %v314 = vadd.f32 %v305, %v311
    %315 = vst.msk [vmem:[%s7] sm:$0xff] %vm122, %v313
    %316 = vst.msk [vmem:[%s7 + $0x8] sm:$0xff] %vm122, %v314
  $region37: #{gpt_forward.9} parent=0 // pred_fallthru
    _
  // Predicated region
  $region38: #{gpt_forward.9} parent=0 // pred_check
    _
  $region39: #{gpt_forward.9} parent=0 // pred_check_branch
    %318 = sbr.rel (0) target = $region41
  $region40: #{gpt_forward.9} parent=0 // pred_region
    _
  $region41: #{gpt_forward.9} parent=0 // pred_fallthru
    _
  // Predicated region
  $region42: #{gpt_forward.9} parent=0 // pred_check
    _
  $region43: #{gpt_forward.9} parent=0 // pred_check_branch
    %320 = sbr.rel (0) target = $region45
  $region44: #{gpt_forward.9} parent=0 // pred_region
    _
  $region45: #{gpt_forward.9} parent=0 // pred_fallthru
    _

// kernel: gpt_forward.8
$region0: #{gpt_forward.8}
  #allocation0 [shape = 'u32[]', space=smem, size = 0x4, offset = 0x4, fixed_abs, tag = 'smem constant byte address 0x4 - core index']
  #allocation1 [shape = 'u32[144,128]{1,0:T(1,128)}', space=vmem, size = 0x12000, scoped, tag = 'internal scratch']
  #allocation2 [shape = 'f32[8,32]{1,0:T(8,128)}', space=vmem, size = 0x1000, scoped, tag = 'scratch operand']
  %s0 = inlined_call_operand.vmem [shape: f32[2,8,32], index: 0, kind: input, shape index: {}]
  %s1 = inlined_call_operand.vmem [shape: bf16[2,8,32], index: 1, kind: input, shape index: {}]
  %s2 = inlined_call_operand.vmem [shape: bf16[2,8,32], index: 2, kind: input, shape index: {}]
  %s3 = inlined_call_operand.vmem [shape: bf16[2,8,32], index: 3, kind: input, shape index: {}]
  %s4 = inlined_call_operand.vmem [shape: bf16[32,32], index: 4, kind: input, shape index: {}]
  %s5 = inlined_call_operand.vmem [shape: f32[1,32], index: 5, kind: input, shape index: {}]
  %s6 = inlined_call_operand.vmem [shape: f32[2,8,32], index: 6, kind: output, shape index: {}]
  %s7 = sld [smem:[#allocation0]]
  $region57: #{gpt_forward.8} parent=0
    _
  %s9 = ssub.s32 1, %s7
  %s10 = scalar_select 0, %s9, %s7
  loop: start=0, step=1, limit=4
  $region2: #{gpt_forward.8} parent=0 // loop_pre_header
    _
  $region3: #{gpt_forward.8} parent=0 // loop_header
    %s12 = sphi 0, %s16
    %p13 = scmp.ge.s32.totalorder %s12, 4
    %s19 = sphi 0, %s31
    %s20 = sphi 0, %s27
    %s21 = sphi 0, %s19
    %s22 = sphi 0, %s20
    %s23 = sphi 0, %s21
    %s24 = sphi 0, %s22
    %s36 = sphi 0, %s38
    %s39 = sphi 0, %s36
    %s40 = sphi 0, %s39
    %s56 = sphi 0, %s40
    %s64 = sphi 0, %s66
    %s67 = sphi 0, %s64
    %s68 = sphi 0, %s67
    %s84 = sphi 0, %s68
    %s90 = sphi 0, %s92
    %s93 = sphi 0, %s90
    %s94 = sphi 0, %s93
    %s110 = sphi 0, %s94
    %s116 = sphi 0, %s118
    %s119 = sphi 0, %s116
    %s120 = sphi 0, %s119
    %s136 = sphi 0, %s120
    %s140 = sphi 0, %s140
    %s142 = sphi 0, %s140
    %s143 = sphi 0, %s142
    %s157 = sphi 0, %s143
    %s161 = sphi 0, %s161
    %s163 = sphi 0, %s161
    %s164 = sphi 0, %s163
    %s178 = sphi 0, %s164
    %s186 = sphi 0, %s188
    %s189 = sphi 0, %s186
    %s190 = sphi 0, %s189
    %s206 = sphi 0, %s190
  $region4: #{gpt_forward.8} parent=0 // loop_header_branch
    %15 = sbr.rel (%p13) target = $region8
  $region5: #{gpt_forward.8} parent=0 // loop_body
    %s17 = ssub.s32 %s12, 1
    %s18 = ssub.s32 %s12, 2
    %s25 = sadd.s32 1, %s20
    %p26 = scmp.ge.s32.totalorder %s25, 1
    %s27 = scalar_select %p26, 0, %s25
    %s28 = sadd.s32 1, %s19
    %s29 = scalar_select %p26, %s28, %s19
    %p30 = scmp.ge.s32.totalorder %s29, 2
    %s31 = scalar_select %p30, 0, %s29
    %s32 = ssub.s32 %s19, %s31
    %s33 = ssub.s32 %s20, %s27
    %s34 = sor.u32 %s32, %s33
    %p35 = scmp.eq.s32.totalorder %s34, 0
    %s37 = sadd.s32 %s36, 1
    %s38 = scalar_select %p35, %s36, %s37
    %p41 = pneg %p35
    %p42 = scmp.eq.s32.totalorder %s12, 1
    %p43 = por %p41, %p42
    %p44 = scmp.ne.s32.totalorder %s36, %s39
    %p45 = scmp.eq.s32.totalorder %s12, 0
    %p46 = por %p44, %p45
    %p47 = scmp.ne.s32.totalorder %s36, %s39
    %p48 = scmp.eq.s32.totalorder %s17, 1
    %p49 = por %p47, %p48
    %p50 = scmp.ne.s32.totalorder %s39, %s40
    %p51 = scmp.eq.s32.totalorder %s17, 0
    %p52 = por %p50, %p51
    %p53 = scmp.ne.s32.totalorder %s39, %s40
    %p54 = scmp.eq.s32.totalorder %s18, 1
    %p55 = por %p53, %p54
    %p57 = scmp.ne.s32.totalorder %s40, %s56
    %p58 = scmp.eq.s32.totalorder %s18, 0
    %p59 = por %p57, %p58
    %s60 = ssub.s32 %s19, %s31
    %s61 = ssub.s32 %s20, %s27
    %s62 = sor.u32 %s60, %s61
    %p63 = scmp.eq.s32.totalorder %s62, 0
    %s65 = sadd.s32 %s64, 1
    %s66 = scalar_select %p63, %s64, %s65
    %p69 = pneg %p63
    %p70 = scmp.eq.s32.totalorder %s12, 1
    %p71 = por %p69, %p70
    %p72 = scmp.ne.s32.totalorder %s64, %s67
    %p73 = scmp.eq.s32.totalorder %s12, 0
    %p74 = por %p72, %p73
    %p75 = scmp.ne.s32.totalorder %s64, %s67
    %p76 = scmp.eq.s32.totalorder %s17, 1
    %p77 = por %p75, %p76
    %p78 = scmp.ne.s32.totalorder %s67, %s68
    %p79 = scmp.eq.s32.totalorder %s17, 0
    %p80 = por %p78, %p79
    %p81 = scmp.ne.s32.totalorder %s67, %s68
    %p82 = scmp.eq.s32.totalorder %s18, 1
    %p83 = por %p81, %p82
    %p85 = scmp.ne.s32.totalorder %s68, %s84
    %p86 = scmp.eq.s32.totalorder %s18, 0
    %p87 = por %p85, %p86
    %s88 = ssub.s32 %s19, %s31
    %p89 = scmp.eq.s32.totalorder %s88, 0
    %s91 = sadd.s32 %s90, 1
    %s92 = scalar_select %p89, %s90, %s91
    %p95 = pneg %p89
    %p96 = scmp.eq.s32.totalorder %s12, 1
    %p97 = por %p95, %p96
    %p98 = scmp.ne.s32.totalorder %s90, %s93
    %p99 = scmp.eq.s32.totalorder %s12, 0
    %p100 = por %p98, %p99
    %p101 = scmp.ne.s32.totalorder %s90, %s93
    %p102 = scmp.eq.s32.totalorder %s17, 1
    %p103 = por %p101, %p102
    %p104 = scmp.ne.s32.totalorder %s93, %s94
    %p105 = scmp.eq.s32.totalorder %s17, 0
    %p106 = por %p104, %p105
    %p107 = scmp.ne.s32.totalorder %s93, %s94
    %p108 = scmp.eq.s32.totalorder %s18, 1
    %p109 = por %p107, %p108
    %p111 = scmp.ne.s32.totalorder %s94, %s110
    %p112 = scmp.eq.s32.totalorder %s18, 0
    %p113 = por %p111, %p112
    %s114 = ssub.s32 %s19, %s31
    %p115 = scmp.eq.s32.totalorder %s114, 0
    %s117 = sadd.s32 %s116, 1
    %s118 = scalar_select %p115, %s116, %s117
    %p121 = pneg %p115
    %p122 = scmp.eq.s32.totalorder %s12, 1
    %p123 = por %p121, %p122
    %p124 = scmp.ne.s32.totalorder %s116, %s119
    %p125 = scmp.eq.s32.totalorder %s12, 0
    %p126 = por %p124, %p125
    %p127 = scmp.ne.s32.totalorder %s116, %s119
    %p128 = scmp.eq.s32.totalorder %s17, 1
    %p129 = por %p127, %p128
    %p130 = scmp.ne.s32.totalorder %s119, %s120
    %p131 = scmp.eq.s32.totalorder %s17, 0
    %p132 = por %p130, %p131
    %p133 = scmp.ne.s32.totalorder %s119, %s120
    %p134 = scmp.eq.s32.totalorder %s18, 1
    %p135 = por %p133, %p134
    %p137 = scmp.ne.s32.totalorder %s120, %s136
    %p138 = scmp.eq.s32.totalorder %s18, 0
    %p139 = por %p137, %p138
    %s141 = sadd.s32 %s140, 1
    %p144 = scmp.eq.s32.totalorder %s12, 1
    %p145 = scmp.ne.s32.totalorder %s140, %s142
    %p146 = scmp.eq.s32.totalorder %s12, 0
    %p147 = por %p145, %p146
    %p148 = scmp.ne.s32.totalorder %s140, %s142
    %p149 = scmp.eq.s32.totalorder %s17, 1
    %p150 = por %p148, %p149
    %p151 = scmp.ne.s32.totalorder %s142, %s143
    %p152 = scmp.eq.s32.totalorder %s17, 0
    %p153 = por %p151, %p152
    %p154 = scmp.ne.s32.totalorder %s142, %s143
    %p155 = scmp.eq.s32.totalorder %s18, 1
    %p156 = por %p154, %p155
    %p158 = scmp.ne.s32.totalorder %s143, %s157
    %p159 = scmp.eq.s32.totalorder %s18, 0
    %p160 = por %p158, %p159
    %s162 = sadd.s32 %s161, 1
    %p165 = scmp.eq.s32.totalorder %s12, 1
    %p166 = scmp.ne.s32.totalorder %s161, %s163
    %p167 = scmp.eq.s32.totalorder %s12, 0
    %p168 = por %p166, %p167
    %p169 = scmp.ne.s32.totalorder %s161, %s163
    %p170 = scmp.eq.s32.totalorder %s17, 1
    %p171 = por %p169, %p170
    %p172 = scmp.ne.s32.totalorder %s163, %s164
    %p173 = scmp.eq.s32.totalorder %s17, 0
    %p174 = por %p172, %p173
    %p175 = scmp.ne.s32.totalorder %s163, %s164
    %p176 = scmp.eq.s32.totalorder %s18, 1
    %p177 = por %p175, %p176
    %p179 = scmp.ne.s32.totalorder %s164, %s178
    %p180 = scmp.eq.s32.totalorder %s18, 0
    %p181 = por %p179, %p180
    %s182 = ssub.s32 %s19, %s31
    %s183 = ssub.s32 %s20, %s27
    %s184 = sor.u32 %s182, %s183
    %p185 = scmp.eq.s32.totalorder %s184, 0
    %s187 = sadd.s32 %s186, 1
    %s188 = scalar_select %p185, %s186, %s187
    %p191 = pneg %p185
    %p192 = scmp.eq.s32.totalorder %s12, 1
    %p193 = por %p191, %p192
    %p194 = scmp.ne.s32.totalorder %s186, %s189
    %p195 = scmp.eq.s32.totalorder %s12, 0
    %p196 = por %p194, %p195
    %p197 = scmp.ne.s32.totalorder %s186, %s189
    %p198 = scmp.eq.s32.totalorder %s17, 1
    %p199 = por %p197, %p198
    %p200 = scmp.ne.s32.totalorder %s189, %s190
    %p201 = scmp.eq.s32.totalorder %s17, 0
    %p202 = por %p200, %p201
    %p203 = scmp.ne.s32.totalorder %s189, %s190
    %p204 = scmp.eq.s32.totalorder %s18, 1
    %p205 = por %p203, %p204
    %p207 = scmp.ne.s32.totalorder %s190, %s206
    %p208 = scmp.eq.s32.totalorder %s18, 0
    %p209 = por %p207, %p208
    %p210 = scmp.le.s32.totalorder 1, %s12
    %p211 = scmp.lt.s32.totalorder %s12, 3
    %p212 = pnand %p210, %p211
    %p213 = pneg %p212
    // Predicated region
    $region9: #{gpt_forward.8} parent=5 // pred_check
      _
    $region10: #{gpt_forward.8} parent=5 // pred_check_branch
      %215 = sbr.rel (%p212) target = $region12
    $region11: #{gpt_forward.8} parent=5 // pred_region
      %s216 = ssub.s32 %s12, 1
      // Predicated region
      $region13: #{gpt_forward.8} parent=11 // pred_check
        %p217 = pneg %p153
      $region14: #{gpt_forward.8} parent=11 // pred_check_branch
        %219 = sbr.rel (%p217) target = $region16
      $region15: #{gpt_forward.8} parent=11 // pred_region
        _
      $region16: #{gpt_forward.8} parent=11 // pred_fallthru
        _
      // Predicated region
      $region17: #{gpt_forward.8} parent=11 // pred_check
        %p220 = pneg %p174
      $region18: #{gpt_forward.8} parent=11 // pred_check_branch
        %222 = sbr.rel (%p220) target = $region20
      $region19: #{gpt_forward.8} parent=11 // pred_region
        _
      $region20: #{gpt_forward.8} parent=11 // pred_fallthru
        _
    $region12: #{gpt_forward.8} parent=5 // pred_fallthru
      _
    %p223 = scmp.lt.s32.totalorder %s12, 2
    // Predicated region
    $region21: #{gpt_forward.8} parent=5 // pred_check
      %p224 = pneg %p223
    $region22: #{gpt_forward.8} parent=5 // pred_check_branch
      %226 = sbr.rel (%p224) target = $region24
    $region23: #{gpt_forward.8} parent=5 // pred_region
      // Predicated region
      $region25: #{gpt_forward.8} parent=23 // pred_check
        %p227 = pneg %p46
      $region26: #{gpt_forward.8} parent=23 // pred_check_branch
        %229 = sbr.rel (%p227) target = $region28
      $region27: #{gpt_forward.8} parent=23 // pred_region
        %p230 = scmp.lt.s32.totalorder %s19, 1
        %s231 = scalar_select %p230, %s19, 1
        %p232 = scmp.lt.s32.totalorder %s20, 0
        %s233 = scalar_select %p232, %s20, 0
        %s234 = sadd.s32 %s233, %s231
        %s235 = smul.addr %s234, 8
        %s236 = scalar_lea.vmem %s0, %s235
      $region28: #{gpt_forward.8} parent=23 // pred_fallthru
        _
      // Predicated region
      $region29: #{gpt_forward.8} parent=23 // pred_check
        %p237 = pneg %p74
      $region30: #{gpt_forward.8} parent=23 // pred_check_branch
        %239 = sbr.rel (%p237) target = $region32
      $region31: #{gpt_forward.8} parent=23 // pred_region
        %p240 = scmp.lt.s32.totalorder %s19, 1
        %s241 = scalar_select %p240, %s19, 1
        %p242 = scmp.lt.s32.totalorder %s20, 0
        %s243 = scalar_select %p242, %s20, 0
        %s244 = sadd.s32 %s243, %s241
        %s245 = smul.addr %s244, 4
        %s246 = scalar_lea.vmem %s1, %s245
      $region32: #{gpt_forward.8} parent=23 // pred_fallthru
        _
      // Predicated region
      $region33: #{gpt_forward.8} parent=23 // pred_check
        %p247 = pneg %p100
      $region34: #{gpt_forward.8} parent=23 // pred_check_branch
        %249 = sbr.rel (%p247) target = $region36
      $region35: #{gpt_forward.8} parent=23 // pred_region
        %p250 = scmp.lt.s32.totalorder %s19, 1
        %s251 = scalar_select %p250, %s19, 1
        %s252 = smul.addr %s251, 4
        %s253 = scalar_lea.vmem %s2, %s252
      $region36: #{gpt_forward.8} parent=23 // pred_fallthru
        _
      // Predicated region
      $region37: #{gpt_forward.8} parent=23 // pred_check
        %p254 = pneg %p126
      $region38: #{gpt_forward.8} parent=23 // pred_check_branch
        %256 = sbr.rel (%p254) target = $region40
      $region39: #{gpt_forward.8} parent=23 // pred_region
        %p257 = scmp.lt.s32.totalorder %s19, 1
        %s258 = scalar_select %p257, %s19, 1
        %s259 = smul.addr %s258, 4
        %s260 = scalar_lea.vmem %s3, %s259
      $region40: #{gpt_forward.8} parent=23 // pred_fallthru
        _
    $region24: #{gpt_forward.8} parent=5 // pred_fallthru
      _
    %p261 = scmp.le.s32.totalorder 1, %s12
    %p262 = scmp.lt.s32.totalorder %s12, 3
    %p263 = pnand %p261, %p262
    %p264 = pneg %p263
    // Predicated region
    $region41: #{gpt_forward.8} parent=5 // pred_check
      _
    $region42: #{gpt_forward.8} parent=5 // pred_check_branch
      %266 = sbr.rel (%p263) target = $region44
    $region43: #{gpt_forward.8} parent=5 // pred_region
      %s267 = ssub.s32 %s12, 1
      %p268 = scmp.lt.s32.totalorder %s21, 1
      %s269 = scalar_select %p268, %s21, 1
      %p270 = scmp.lt.s32.totalorder %s22, 0
      %s271 = scalar_select %p270, %s22, 0
      %s272 = sadd.s32 %s271, %s269
      %s273 = smul.addr %s272, 8
      %s274 = scalar_lea.vmem %s0, %s273
      %p275 = pneg %p52
      %p276 = pneg %p49
      %p277 = scmp.lt.s32.totalorder %s21, 1
      %s278 = scalar_select %p277, %s21, 1
      %p279 = scmp.lt.s32.totalorder %s22, 0
      %s280 = scalar_select %p279, %s22, 0
      %s281 = sadd.s32 %s280, %s278
      %s282 = smul.addr %s281, 4
      %s283 = scalar_lea.vmem %s1, %s282
      %p284 = pneg %p80
      %p285 = pneg %p77
      %p286 = scmp.lt.s32.totalorder %s21, 1
      %s287 = scalar_select %p286, %s21, 1
      %s288 = smul.addr %s287, 4
      %s289 = scalar_lea.vmem %s2, %s288
      %p290 = pneg %p106
      %p291 = pneg %p103
      %p292 = scmp.lt.s32.totalorder %s21, 1
      %s293 = scalar_select %p292, %s21, 1
      %s294 = smul.addr %s293, 4
      %s295 = scalar_lea.vmem %s3, %s294
      %p296 = pneg %p132
      %p297 = pneg %p129
      %p298 = pneg %p153
      %p299 = pneg %p150
      %p300 = pneg %p174
      %p301 = pneg %p171
      %p302 = pneg %p202
      %p303 = pneg %p199
      %p304 = scmp.lt.s32.totalorder %s21, 1
      %s305 = scalar_select %p304, %s21, 1
      %p306 = scmp.lt.s32.totalorder %s22, 0
      %s307 = scalar_select %p306, %s22, 0
      %s308 = sadd.s32 %s307, %s305
      %s309 = smul.addr %s308, 8
      %s310 = scalar_lea.vmem %s6, %s309
      %p311 = scmp.lt.s32.totalorder %s21, 1
      %s312 = scalar_select %p311, %s21, 1
      %p313 = scmp.lt.s32.totalorder %s22, 0
      %s314 = scalar_select %p313, %s22, 0
      %s315 = sadd.s32 %s314, %s312
      %s316 = smul.addr %s315, 8
      %s317 = scalar_lea.vmem %s0, %s316
      %p318 = scmp.lt.s32.totalorder %s21, 1
      %s319 = scalar_select %p318, %s21, 1
      %p320 = scmp.lt.s32.totalorder %s22, 0
      %s321 = scalar_select %p320, %s22, 0
      %s322 = sadd.s32 %s321, %s319
      %s323 = smul.addr %s322, 4
      %s324 = scalar_lea.vmem %s1, %s323
      %p325 = scmp.lt.s32.totalorder %s21, 1
      %s326 = scalar_select %p325, %s21, 1
      %s327 = smul.addr %s326, 4
      %s328 = scalar_lea.vmem %s2, %s327
      %p329 = scmp.lt.s32.totalorder %s21, 1
      %s330 = scalar_select %p329, %s21, 1
      %s331 = smul.addr %s330, 4
      %s332 = scalar_lea.vmem %s3, %s331
      %p333 = scmp.lt.s32.totalorder %s21, 1
      %s334 = scalar_select %p333, %s21, 1
      %p335 = scmp.lt.s32.totalorder %s22, 0
      %s336 = scalar_select %p335, %s22, 0
      %s337 = sadd.s32 %s336, %s334
      %s338 = smul.addr %s337, 8
      %s339 = scalar_lea.vmem %s6, %s338
      %s341 = smul.u32 %s22, 8
      %v342 = vlaneseq
      %v343 = vshrl.u32 %v342, 7
      %v344 = vstv %s341
      %v345 = vadd.s32 %v343, %v344
      %v346 = vlaneseq
      %v347 = vand.u32 %v346, 127
      %vm348 = vcmp.gt.s32.totalorder %v347, %v345
      %vm349 = vcmask 261120
      %350 = vst.msk [vmem:[#allocation2] sm:$0xff] %vm349, 0.0
      %v351 = vld [vmem:[%s324] sm:$0xf]
      %v352 = vld [vmem:[%s328] sm:$0xf]
      %v353 = vld [vmem:[%s332] sm:$0xf]
      %vm354 = vcmask 64512
      %v356 = vsel %vm354, %v351, 0
      %v359 = vsel %vm354, %v352, 0
      %361 = vmatprep.subr.bf16.mxu0 0
      %362 = vmatpush1.bf16.xpose.msra.mxu0 0
      %363 = vmatprep.subr.bf16.mxu0 0
      %364 = vmatpush1.bf16.xpose.msra.mxu0 0
      %365 = vmatprep.subr.bf16.mxu0 0
      %366 = vmatpush1.bf16.xpose.msra.mxu0 0
      %367 = vmatprep.subr.bf16.mxu0 0
      %368 = vmatpush1.bf16.xpose.msra.mxu0 0
      %369 = vmatprep.subr.bf16.mxu0 0
      %370 = vmatpush1.bf16.xpose.msra.mxu0 0
      %371 = vmatprep.subr.bf16.mxu0 0
      %372 = vmatpush1.bf16.xpose.msra.mxu0 0
      %373 = vmatprep.subr.bf16.mxu0 0
      %374 = vmatpush1.bf16.xpose.msra.mxu0 0
      %375 = vmatprep.subr.bf16.mxu0 0
      %376 = vmatpush1.bf16.xpose.msra.mxu0 %v359
      %377 = vmatprep.subr.bf16.mxu0 0
      %378 = vmatpush2.bf16.xpose.msra.mxu0 0
      %379 = vmatprep.subr.bf16.mxu0 0
      %380 = vmatpush2.bf16.xpose.msra.mxu0 0
      %381 = vmatprep.subr.bf16.mxu0 0
      %382 = vmatpush2.bf16.xpose.msra.mxu0 0
      %383 = vmatprep.subr.bf16.mxu0 0
      %384 = vmatpush2.bf16.xpose.msra.mxu0 0
      %385 = vmatprep.subr.bf16.mxu0 0
      %386 = vmatpush2.bf16.xpose.msra.mxu0 0
      %387 = vmatprep.subr.bf16.mxu0 0
      %388 = vmatpush2.bf16.xpose.msra.mxu0 0
      %389 = vmatprep.subr.bf16.mxu0 0
      %390 = vmatpush2.bf16.xpose.msra.mxu0 0
      %391 = vmatprep.subr.bf16.mxu0 0
      %392 = vmatpush2.bf16.xpose.msra.mxu0 0
      %393 = vmatprep.mubr.bf16.mxu0 0
      %394 = vmatmul.mubr.bf16.gmra.mxu0 %v356
      %v395 = vpop.f32.mrf.mxu0
      %v396 = vadd.f32 0.0, %v395
      %v397 = vpop.f32.mrf.mxu0
      %v398 = vpop.f32.mrf.mxu0
      %v399 = vpop.f32.mrf.mxu0
      %400 = vdwg.mxu0
      %v401 = vsel %vm348, -1e+30, %v396
      %v402 = vsel %vm354, %v401, -inf
      %403 = vmax.xlane.f32.xlu0 %v402
      %v404 = vpop.xlane.xlu0 %403
      %v405 = vsub.f32 %v401, %v404
      %v406 = vmul.f32 %v405, 1.442695
      %v407 = vpow.pop %v406
      %v408 = vsel %vm354, %v407, 0.0
      %409 = vadd.xlane.f32.xlu0 %v408
      %v410 = vpop.xlane.xlu0 %409
      %v411 = vrcp.pop %v410
      %v412 = vmul.f32 %v407, %v411
      %v413 = vpack.c.bf16 %v412, %v412
      %v415 = vsel %vm354, %v413, 0
      %vm417 = vcmask 1043456
      %v419 = vsel %vm417, %v353, 0
      %421 = vmatprep.subr.bf16.mxu0 0
      %422 = vmatpush1.bf16.msra.mxu0 0
      %423 = vmatprep.subr.bf16.mxu0 0
      %424 = vmatpush1.bf16.msra.mxu0 0
      %425 = vmatprep.subr.bf16.mxu0 0
      %426 = vmatpush1.bf16.msra.mxu0 0
      %427 = vmatprep.subr.bf16.mxu0 0
      %428 = vmatpush1.bf16.msra.mxu0 0
      %429 = vmatprep.subr.bf16.mxu0 0
      %430 = vmatpush1.bf16.msra.mxu0 0
      %431 = vmatprep.subr.bf16.mxu0 0
      %432 = vmatpush1.bf16.msra.mxu0 0
      %433 = vmatprep.subr.bf16.mxu0 0
      %434 = vmatpush1.bf16.msra.mxu0 0
      %435 = vmatprep.subr.bf16.mxu0 0
      %436 = vmatpush1.bf16.msra.mxu0 %v419
      %437 = vmatprep.subr.bf16.mxu0 0
      %438 = vmatpush2.bf16.msra.mxu0 0
      %439 = vmatprep.subr.bf16.mxu0 0
      %440 = vmatpush2.bf16.msra.mxu0 0
      %441 = vmatprep.subr.bf16.mxu0 0
      %442 = vmatpush2.bf16.msra.mxu0 0
      %443 = vmatprep.subr.bf16.mxu0 0
      %444 = vmatpush2.bf16.msra.mxu0 0
      %445 = vmatprep.subr.bf16.mxu0 0
      %446 = vmatpush2.bf16.msra.mxu0 0
      %447 = vmatprep.subr.bf16.mxu0 0
      %448 = vmatpush2.bf16.msra.mxu0 0
      %449 = vmatprep.subr.bf16.mxu0 0
      %450 = vmatpush2.bf16.msra.mxu0 0
      %451 = vmatprep.subr.bf16.mxu0 0
      %452 = vmatpush2.bf16.msra.mxu0 0
      %453 = vmatprep.mubr.bf16.mxu0 0
      %454 = vmatmul.mubr.bf16.gmra.mxu0 %v415
      %v455 = vpop.f32.mrf.mxu0
      %v456 = vadd.f32 0.0, %v455
      %v457 = vpop.f32.mrf.mxu0
      %v458 = vpop.f32.mrf.mxu0
      %v459 = vpop.f32.mrf.mxu0
      %460 = vdwg.mxu0
      %v461 = vld [vmem:[#allocation2] sm:$0xff]
      %v462 = vpack.c.bf16 %v456, %v456
      %v463 = vld [vmem:[%s4] sm:$0xf]
      %v465 = vsel %vm354, %v462, 0
      %v468 = vsel %vm417, %v463, 0
      %470 = vmatprep.subr.bf16.mxu0 0
      %471 = vmatpush1.bf16.msra.mxu0 0
      %472 = vmatprep.subr.bf16.mxu0 0
      %473 = vmatpush1.bf16.msra.mxu0 0
      %474 = vmatprep.subr.bf16.mxu0 0
      %475 = vmatpush1.bf16.msra.mxu0 0
      %476 = vmatprep.subr.bf16.mxu0 0
      %477 = vmatpush1.bf16.msra.mxu0 0
      %478 = vmatprep.subr.bf16.mxu0 0
      %479 = vmatpush1.bf16.msra.mxu0 0
      %480 = vmatprep.subr.bf16.mxu0 0
      %481 = vmatpush1.bf16.msra.mxu0 0
      %482 = vmatprep.subr.bf16.mxu0 0
      %483 = vmatpush1.bf16.msra.mxu0 0
      %484 = vmatprep.subr.bf16.mxu0 0
      %485 = vmatpush1.bf16.msra.mxu0 %v468
      %486 = vmatprep.subr.bf16.mxu0 0
      %487 = vmatpush2.bf16.msra.mxu0 0
      %488 = vmatprep.subr.bf16.mxu0 0
      %489 = vmatpush2.bf16.msra.mxu0 0
      %490 = vmatprep.subr.bf16.mxu0 0
      %491 = vmatpush2.bf16.msra.mxu0 0
      %492 = vmatprep.subr.bf16.mxu0 0
      %493 = vmatpush2.bf16.msra.mxu0 0
      %494 = vmatprep.subr.bf16.mxu0 0
      %495 = vmatpush2.bf16.msra.mxu0 0
      %496 = vmatprep.subr.bf16.mxu0 0
      %497 = vmatpush2.bf16.msra.mxu0 0
      %498 = vmatprep.subr.bf16.mxu0 0
      %499 = vmatpush2.bf16.msra.mxu0 0
      %500 = vmatprep.subr.bf16.mxu0 0
      %501 = vmatpush2.bf16.msra.mxu0 0
      %502 = vmatprep.mubr.bf16.mxu0 0
      %503 = vmatmul.mubr.bf16.gmra.mxu0 %v465
      %v504 = vpop.f32.mrf.mxu0
      %v505 = vadd.f32 0.0, %v504
      %v506 = vpop.f32.mrf.mxu0
      %v507 = vpop.f32.mrf.mxu0
      %v508 = vpop.f32.mrf.mxu0
      %509 = vdwg.mxu0
      %v510 = vadd.f32 %v461, %v505
      %511 = vst.msk [vmem:[#allocation2] sm:$0xff] %vm349, %v510
      %v512 = vld [vmem:[%s324] sm:$0xf]
      %v513 = vld [vmem:[%s328] sm:$0xf]
      %v514 = vld [vmem:[%s332] sm:$0xf]
      %v516 = vunpack.c.l.b16 %v512
      %v517 = vpack.c.b16 %v516, %v516
      %518 = vrot.lane.b32.xlu0 %v517, 120
      %v519 = vpop.permute.xlu0 %518
      %v521 = vunpack.c.l.b16 %v513
      %v522 = vpack.c.b16 %v521, %v521
      %523 = vrot.lane.b32.xlu0 %v522, 120
      %v524 = vpop.permute.xlu0 %523
      %v526 = vsel %vm354, %v519, 0
      %v529 = vsel %vm354, %v524, 0
      %531 = vmatprep.subr.bf16.mxu0 0
      %532 = vmatpush1.bf16.xpose.msra.mxu0 0
      %533 = vmatprep.subr.bf16.mxu0 0
      %534 = vmatpush1.bf16.xpose.msra.mxu0 0
      %535 = vmatprep.subr.bf16.mxu0 0
      %536 = vmatpush1.bf16.xpose.msra.mxu0 0
      %537 = vmatprep.subr.bf16.mxu0 0
      %538 = vmatpush1.bf16.xpose.msra.mxu0 0
      %539 = vmatprep.subr.bf16.mxu0 0
      %540 = vmatpush1.bf16.xpose.msra.mxu0 0
      %541 = vmatprep.subr.bf16.mxu0 0
      %542 = vmatpush1.bf16.xpose.msra.mxu0 0
      %543 = vmatprep.subr.bf16.mxu0 0
      %544 = vmatpush1.bf16.xpose.msra.mxu0 0
      %545 = vmatprep.subr.bf16.mxu0 0
      %546 = vmatpush1.bf16.xpose.msra.mxu0 %v529
      %547 = vmatprep.subr.bf16.mxu0 0
      %548 = vmatpush2.bf16.xpose.msra.mxu0 0
      %549 = vmatprep.subr.bf16.mxu0 0
      %550 = vmatpush2.bf16.xpose.msra.mxu0 0
      %551 = vmatprep.subr.bf16.mxu0 0
      %552 = vmatpush2.bf16.xpose.msra.mxu0 0
      %553 = vmatprep.subr.bf16.mxu0 0
      %554 = vmatpush2.bf16.xpose.msra.mxu0 0
      %555 = vmatprep.subr.bf16.mxu0 0
      %556 = vmatpush2.bf16.xpose.msra.mxu0 0
      %557 = vmatprep.subr.bf16.mxu0 0
      %558 = vmatpush2.bf16.xpose.msra.mxu0 0
      %559 = vmatprep.subr.bf16.mxu0 0
      %560 = vmatpush2.bf16.xpose.msra.mxu0 0
      %561 = vmatprep.subr.bf16.mxu0 0
      %562 = vmatpush2.bf16.xpose.msra.mxu0 0
      %563 = vmatprep.mubr.bf16.mxu0 0
      %564 = vmatmul.mubr.bf16.gmra.mxu0 %v526
      %v565 = vpop.f32.mrf.mxu0
      %v566 = vadd.f32 0.0, %v565
      %v567 = vpop.f32.mrf.mxu0
      %v568 = vpop.f32.mrf.mxu0
      %v569 = vpop.f32.mrf.mxu0
      %570 = vdwg.mxu0
      %v571 = vsel %vm348, -1e+30, %v566
      %v572 = vsel %vm354, %v571, -inf
      %573 = vmax.xlane.f32.xlu0 %v572
      %v574 = vpop.xlane.xlu0 %573
      %v575 = vsub.f32 %v571, %v574
      %v576 = vmul.f32 %v575, 1.442695
      %v577 = vpow.pop %v576
      %v578 = vsel %vm354, %v577, 0.0
      %579 = vadd.xlane.f32.xlu0 %v578
      %v580 = vpop.xlane.xlu0 %579
      %v581 = vrcp.pop %v580
      %v582 = vmul.f32 %v577, %v581
      %v583 = vpack.c.bf16 %v582, %v582
      %v585 = vunpack.c.l.b16 %v514
      %v586 = vpack.c.b16 %v585, %v585
      %587 = vrot.lane.b32.xlu0 %v586, 120
      %v588 = vpop.permute.xlu0 %587
      %v590 = vsel %vm354, %v583, 0
      %v593 = vsel %vm417, %v588, 0
      %595 = vmatprep.subr.bf16.mxu0 0
      %596 = vmatpush1.bf16.msra.mxu0 0
      %597 = vmatprep.subr.bf16.mxu0 0
      %598 = vmatpush1.bf16.msra.mxu0 0
      %599 = vmatprep.subr.bf16.mxu0 0
      %600 = vmatpush1.bf16.msra.mxu0 0
      %601 = vmatprep.subr.bf16.mxu0 0
      %602 = vmatpush1.bf16.msra.mxu0 0
      %603 = vmatprep.subr.bf16.mxu0 0
      %604 = vmatpush1.bf16.msra.mxu0 0
      %605 = vmatprep.subr.bf16.mxu0 0
      %606 = vmatpush1.bf16.msra.mxu0 0
      %607 = vmatprep.subr.bf16.mxu0 0
      %608 = vmatpush1.bf16.msra.mxu0 0
      %609 = vmatprep.subr.bf16.mxu0 0
      %610 = vmatpush1.bf16.msra.mxu0 %v593
      %611 = vmatprep.subr.bf16.mxu0 0
      %612 = vmatpush2.bf16.msra.mxu0 0
      %613 = vmatprep.subr.bf16.mxu0 0
      %614 = vmatpush2.bf16.msra.mxu0 0
      %615 = vmatprep.subr.bf16.mxu0 0
      %616 = vmatpush2.bf16.msra.mxu0 0
      %617 = vmatprep.subr.bf16.mxu0 0
      %618 = vmatpush2.bf16.msra.mxu0 0
      %619 = vmatprep.subr.bf16.mxu0 0
      %620 = vmatpush2.bf16.msra.mxu0 0
      %621 = vmatprep.subr.bf16.mxu0 0
      %622 = vmatpush2.bf16.msra.mxu0 0
      %623 = vmatprep.subr.bf16.mxu0 0
      %624 = vmatpush2.bf16.msra.mxu0 0
      %625 = vmatprep.subr.bf16.mxu0 0
      %626 = vmatpush2.bf16.msra.mxu0 0
      %627 = vmatprep.mubr.bf16.mxu0 0
      %628 = vmatmul.mubr.bf16.gmra.mxu0 %v590
      %v629 = vpop.f32.mrf.mxu0
      %v630 = vadd.f32 0.0, %v629
      %v631 = vpop.f32.mrf.mxu0
      %v632 = vpop.f32.mrf.mxu0
      %v633 = vpop.f32.mrf.mxu0
      %634 = vdwg.mxu0
      %v635 = vld [vmem:[#allocation2] sm:$0xff]
      %v636 = vpack.c.bf16 %v630, %v630
      %v637 = vld [vmem:[%s4 + $0x4] sm:$0xf]
      %v639 = vsel %vm354, %v636, 0
      %v642 = vsel %vm417, %v637, 0
      %644 = vmatprep.subr.bf16.mxu0 0
      %645 = vmatpush1.bf16.msra.mxu0 0
      %646 = vmatprep.subr.bf16.mxu0 0
      %647 = vmatpush1.bf16.msra.mxu0 0
      %648 = vmatprep.subr.bf16.mxu0 0
      %649 = vmatpush1.bf16.msra.mxu0 0
      %650 = vmatprep.subr.bf16.mxu0 0
      %651 = vmatpush1.bf16.msra.mxu0 0
      %652 = vmatprep.subr.bf16.mxu0 0
      %653 = vmatpush1.bf16.msra.mxu0 0
      %654 = vmatprep.subr.bf16.mxu0 0
      %655 = vmatpush1.bf16.msra.mxu0 0
      %656 = vmatprep.subr.bf16.mxu0 0
      %657 = vmatpush1.bf16.msra.mxu0 0
      %658 = vmatprep.subr.bf16.mxu0 0
      %659 = vmatpush1.bf16.msra.mxu0 %v642
      %660 = vmatprep.subr.bf16.mxu0 0
      %661 = vmatpush2.bf16.msra.mxu0 0
      %662 = vmatprep.subr.bf16.mxu0 0
      %663 = vmatpush2.bf16.msra.mxu0 0
      %664 = vmatprep.subr.bf16.mxu0 0
      %665 = vmatpush2.bf16.msra.mxu0 0
      %666 = vmatprep.subr.bf16.mxu0 0
      %667 = vmatpush2.bf16.msra.mxu0 0
      %668 = vmatprep.subr.bf16.mxu0 0
      %669 = vmatpush2.bf16.msra.mxu0 0
      %670 = vmatprep.subr.bf16.mxu0 0
      %671 = vmatpush2.bf16.msra.mxu0 0
      %672 = vmatprep.subr.bf16.mxu0 0
      %673 = vmatpush2.bf16.msra.mxu0 0
      %674 = vmatprep.subr.bf16.mxu0 0
      %675 = vmatpush2.bf16.msra.mxu0 0
      %676 = vmatprep.mubr.bf16.mxu0 0
      %677 = vmatmul.mubr.bf16.gmra.mxu0 %v639
      %v678 = vpop.f32.mrf.mxu0
      %v679 = vadd.f32 0.0, %v678
      %v680 = vpop.f32.mrf.mxu0
      %v681 = vpop.f32.mrf.mxu0
      %v682 = vpop.f32.mrf.mxu0
      %683 = vdwg.mxu0
      %v684 = vadd.f32 %v635, %v679
      %685 = vst.msk [vmem:[#allocation2] sm:$0xff] %vm349, %v684
      %v686 = vld [vmem:[%s324] sm:$0xf]
      %v687 = vld [vmem:[%s328] sm:$0xf]
      %v688 = vld [vmem:[%s332] sm:$0xf]
      %v690 = vunpack.c.l.b16 %v686
      %v691 = vpack.c.b16 %v690, %v690
      %692 = vrot.lane.b32.xlu0 %v691, 112
      %v693 = vpop.permute.xlu0 %692
      %v695 = vunpack.c.l.b16 %v687
      %v696 = vpack.c.b16 %v695, %v695
      %697 = vrot.lane.b32.xlu0 %v696, 112
      %v698 = vpop.permute.xlu0 %697
      %v700 = vsel %vm354, %v693, 0
      %v703 = vsel %vm354, %v698, 0
      %705 = vmatprep.subr.bf16.mxu0 0
      %706 = vmatpush1.bf16.xpose.msra.mxu0 0
      %707 = vmatprep.subr.bf16.mxu0 0
      %708 = vmatpush1.bf16.xpose.msra.mxu0 0
      %709 = vmatprep.subr.bf16.mxu0 0
      %710 = vmatpush1.bf16.xpose.msra.mxu0 0
      %711 = vmatprep.subr.bf16.mxu0 0
      %712 = vmatpush1.bf16.xpose.msra.mxu0 0
      %713 = vmatprep.subr.bf16.mxu0 0
      %714 = vmatpush1.bf16.xpose.msra.mxu0 0
      %715 = vmatprep.subr.bf16.mxu0 0
      %716 = vmatpush1.bf16.xpose.msra.mxu0 0
      %717 = vmatprep.subr.bf16.mxu0 0
      %718 = vmatpush1.bf16.xpose.msra.mxu0 0
      %719 = vmatprep.subr.bf16.mxu0 0
      %720 = vmatpush1.bf16.xpose.msra.mxu0 %v703
      %721 = vmatprep.subr.bf16.mxu0 0
      %722 = vmatpush2.bf16.xpose.msra.mxu0 0
      %723 = vmatprep.subr.bf16.mxu0 0
      %724 = vmatpush2.bf16.xpose.msra.mxu0 0
      %725 = vmatprep.subr.bf16.mxu0 0
      %726 = vmatpush2.bf16.xpose.msra.mxu0 0
      %727 = vmatprep.subr.bf16.mxu0 0
      %728 = vmatpush2.bf16.xpose.msra.mxu0 0
      %729 = vmatprep.subr.bf16.mxu0 0
      %730 = vmatpush2.bf16.xpose.msra.mxu0 0
      %731 = vmatprep.subr.bf16.mxu0 0
      %732 = vmatpush2.bf16.xpose.msra.mxu0 0
      %733 = vmatprep.subr.bf16.mxu0 0
      %734 = vmatpush2.bf16.xpose.msra.mxu0 0
      %735 = vmatprep.subr.bf16.mxu0 0
      %736 = vmatpush2.bf16.xpose.msra.mxu0 0
      %737 = vmatprep.mubr.bf16.mxu0 0
      %738 = vmatmul.mubr.bf16.gmra.mxu0 %v700
      %v739 = vpop.f32.mrf.mxu0
      %v740 = vadd.f32 0.0, %v739
      %v741 = vpop.f32.mrf.mxu0
      %v742 = vpop.f32.mrf.mxu0
      %v743 = vpop.f32.mrf.mxu0
      %744 = vdwg.mxu0
      %v745 = vsel %vm348, -1e+30, %v740
      %v746 = vsel %vm354, %v745, -inf
      %747 = vmax.xlane.f32.xlu0 %v746
      %v748 = vpop.xlane.xlu0 %747
      %v749 = vsub.f32 %v745, %v748
      %v750 = vmul.f32 %v749, 1.442695
      %v751 = vpow.pop %v750
      %v752 = vsel %vm354, %v751, 0.0
      %753 = vadd.xlane.f32.xlu0 %v752
      %v754 = vpop.xlane.xlu0 %753
      %v755 = vrcp.pop %v754
      %v756 = vmul.f32 %v751, %v755
      %v757 = vpack.c.bf16 %v756, %v756
      %v759 = vunpack.c.l.b16 %v688
      %v760 = vpack.c.b16 %v759, %v759
      %761 = vrot.lane.b32.xlu0 %v760, 112
      %v762 = vpop.permute.xlu0 %761
      %v764 = vsel %vm354, %v757, 0
      %v767 = vsel %vm417, %v762, 0
      %769 = vmatprep.subr.bf16.mxu0 0
      %770 = vmatpush1.bf16.msra.mxu0 0
      %771 = vmatprep.subr.bf16.mxu0 0
      %772 = vmatpush1.bf16.msra.mxu0 0
      %773 = vmatprep.subr.bf16.mxu0 0
      %774 = vmatpush1.bf16.msra.mxu0 0
      %775 = vmatprep.subr.bf16.mxu0 0
      %776 = vmatpush1.bf16.msra.mxu0 0
      %777 = vmatprep.subr.bf16.mxu0 0
      %778 = vmatpush1.bf16.msra.mxu0 0
      %779 = vmatprep.subr.bf16.mxu0 0
      %780 = vmatpush1.bf16.msra.mxu0 0
      %781 = vmatprep.subr.bf16.mxu0 0
      %782 = vmatpush1.bf16.msra.mxu0 0
      %783 = vmatprep.subr.bf16.mxu0 0
      %784 = vmatpush1.bf16.msra.mxu0 %v767
      %785 = vmatprep.subr.bf16.mxu0 0
      %786 = vmatpush2.bf16.msra.mxu0 0
      %787 = vmatprep.subr.bf16.mxu0 0
      %788 = vmatpush2.bf16.msra.mxu0 0
      %789 = vmatprep.subr.bf16.mxu0 0
      %790 = vmatpush2.bf16.msra.mxu0 0
      %791 = vmatprep.subr.bf16.mxu0 0
      %792 = vmatpush2.bf16.msra.mxu0 0
      %793 = vmatprep.subr.bf16.mxu0 0
      %794 = vmatpush2.bf16.msra.mxu0 0
      %795 = vmatprep.subr.bf16.mxu0 0
      %796 = vmatpush2.bf16.msra.mxu0 0
      %797 = vmatprep.subr.bf16.mxu0 0
      %798 = vmatpush2.bf16.msra.mxu0 0
      %799 = vmatprep.subr.bf16.mxu0 0
      %800 = vmatpush2.bf16.msra.mxu0 0
      %801 = vmatprep.mubr.bf16.mxu0 0
      %802 = vmatmul.mubr.bf16.gmra.mxu0 %v764
      %v803 = vpop.f32.mrf.mxu0
      %v804 = vadd.f32 0.0, %v803
      %v805 = vpop.f32.mrf.mxu0
      %v806 = vpop.f32.mrf.mxu0
      %v807 = vpop.f32.mrf.mxu0
      %808 = vdwg.mxu0
      %v809 = vld [vmem:[#allocation2] sm:$0xff]
      %v810 = vpack.c.bf16 %v804, %v804
      %v811 = vld [vmem:[%s4 + $0x8] sm:$0xf]
      %v813 = vsel %vm354, %v810, 0
      %v816 = vsel %vm417, %v811, 0
      %818 = vmatprep.subr.bf16.mxu0 0
      %819 = vmatpush1.bf16.msra.mxu0 0
      %820 = vmatprep.subr.bf16.mxu0 0
      %821 = vmatpush1.bf16.msra.mxu0 0
      %822 = vmatprep.subr.bf16.mxu0 0
      %823 = vmatpush1.bf16.msra.mxu0 0
      %824 = vmatprep.subr.bf16.mxu0 0
      %825 = vmatpush1.bf16.msra.mxu0 0
      %826 = vmatprep.subr.bf16.mxu0 0
      %827 = vmatpush1.bf16.msra.mxu0 0
      %828 = vmatprep.subr.bf16.mxu0 0
      %829 = vmatpush1.bf16.msra.mxu0 0
      %830 = vmatprep.subr.bf16.mxu0 0
      %831 = vmatpush1.bf16.msra.mxu0 0
      %832 = vmatprep.subr.bf16.mxu0 0
      %833 = vmatpush1.bf16.msra.mxu0 %v816
      %834 = vmatprep.subr.bf16.mxu0 0
      %835 = vmatpush2.bf16.msra.mxu0 0
      %836 = vmatprep.subr.bf16.mxu0 0
      %837 = vmatpush2.bf16.msra.mxu0 0
      %838 = vmatprep.subr.bf16.mxu0 0
      %839 = vmatpush2.bf16.msra.mxu0 0
      %840 = vmatprep.subr.bf16.mxu0 0
      %841 = vmatpush2.bf16.msra.mxu0 0
      %842 = vmatprep.subr.bf16.mxu0 0
      %843 = vmatpush2.bf16.msra.mxu0 0
      %844 = vmatprep.subr.bf16.mxu0 0
      %845 = vmatpush2.bf16.msra.mxu0 0
      %846 = vmatprep.subr.bf16.mxu0 0
      %847 = vmatpush2.bf16.msra.mxu0 0
      %848 = vmatprep.subr.bf16.mxu0 0
      %849 = vmatpush2.bf16.msra.mxu0 0
      %850 = vmatprep.mubr.bf16.mxu0 0
      %851 = vmatmul.mubr.bf16.gmra.mxu0 %v813
      %v852 = vpop.f32.mrf.mxu0
      %v853 = vadd.f32 0.0, %v852
      %v854 = vpop.f32.mrf.mxu0
      %v855 = vpop.f32.mrf.mxu0
      %v856 = vpop.f32.mrf.mxu0
      %857 = vdwg.mxu0
      %v858 = vadd.f32 %v809, %v853
      %859 = vst.msk [vmem:[#allocation2] sm:$0xff] %vm349, %v858
      %v860 = vld [vmem:[%s324] sm:$0xf]
      %v861 = vld [vmem:[%s328] sm:$0xf]
      %v862 = vld [vmem:[%s332] sm:$0xf]
      %v864 = vunpack.c.l.b16 %v860
      %v865 = vpack.c.b16 %v864, %v864
      %866 = vrot.lane.b32.xlu0 %v865, 104
      %v867 = vpop.permute.xlu0 %866
      %v869 = vunpack.c.l.b16 %v861
      %v870 = vpack.c.b16 %v869, %v869
      %871 = vrot.lane.b32.xlu0 %v870, 104
      %v872 = vpop.permute.xlu0 %871
      %v874 = vsel %vm354, %v867, 0
      %v877 = vsel %vm354, %v872, 0
      %879 = vmatprep.subr.bf16.mxu0 0
      %880 = vmatpush1.bf16.xpose.msra.mxu0 0
      %881 = vmatprep.subr.bf16.mxu0 0
      %882 = vmatpush1.bf16.xpose.msra.mxu0 0
      %883 = vmatprep.subr.bf16.mxu0 0
      %884 = vmatpush1.bf16.xpose.msra.mxu0 0
      %885 = vmatprep.subr.bf16.mxu0 0
      %886 = vmatpush1.bf16.xpose.msra.mxu0 0
      %887 = vmatprep.subr.bf16.mxu0 0
      %888 = vmatpush1.bf16.xpose.msra.mxu0 0
      %889 = vmatprep.subr.bf16.mxu0 0
      %890 = vmatpush1.bf16.xpose.msra.mxu0 0
      %891 = vmatprep.subr.bf16.mxu0 0
      %892 = vmatpush1.bf16.xpose.msra.mxu0 0
      %893 = vmatprep.subr.bf16.mxu0 0
      %894 = vmatpush1.bf16.xpose.msra.mxu0 %v877
      %895 = vmatprep.subr.bf16.mxu0 0
      %896 = vmatpush2.bf16.xpose.msra.mxu0 0
      %897 = vmatprep.subr.bf16.mxu0 0
      %898 = vmatpush2.bf16.xpose.msra.mxu0 0
      %899 = vmatprep.subr.bf16.mxu0 0
      %900 = vmatpush2.bf16.xpose.msra.mxu0 0
      %901 = vmatprep.subr.bf16.mxu0 0
      %902 = vmatpush2.bf16.xpose.msra.mxu0 0
      %903 = vmatprep.subr.bf16.mxu0 0
      %904 = vmatpush2.bf16.xpose.msra.mxu0 0
      %905 = vmatprep.subr.bf16.mxu0 0
      %906 = vmatpush2.bf16.xpose.msra.mxu0 0
      %907 = vmatprep.subr.bf16.mxu0 0
      %908 = vmatpush2.bf16.xpose.msra.mxu0 0
      %909 = vmatprep.subr.bf16.mxu0 0
      %910 = vmatpush2.bf16.xpose.msra.mxu0 0
      %911 = vmatprep.mubr.bf16.mxu0 0
      %912 = vmatmul.mubr.bf16.gmra.mxu0 %v874
      %v913 = vpop.f32.mrf.mxu0
      %v914 = vadd.f32 0.0, %v913
      %v915 = vpop.f32.mrf.mxu0
      %v916 = vpop.f32.mrf.mxu0
      %v917 = vpop.f32.mrf.mxu0
      %918 = vdwg.mxu0
      %v919 = vsel %vm348, -1e+30, %v914
      %v920 = vsel %vm354, %v919, -inf
      %921 = vmax.xlane.f32.xlu0 %v920
      %v922 = vpop.xlane.xlu0 %921
      %v923 = vsub.f32 %v919, %v922
      %v924 = vmul.f32 %v923, 1.442695
      %v925 = vpow.pop %v924
      %v926 = vsel %vm354, %v925, 0.0
      %927 = vadd.xlane.f32.xlu0 %v926
      %v928 = vpop.xlane.xlu0 %927
      %v929 = vrcp.pop %v928
      %v930 = vmul.f32 %v925, %v929
      %v931 = vpack.c.bf16 %v930, %v930
      %v933 = vunpack.c.l.b16 %v862
      %v934 = vpack.c.b16 %v933, %v933
      %935 = vrot.lane.b32.xlu0 %v934, 104
      %v936 = vpop.permute.xlu0 %935
      %v938 = vsel %vm354, %v931, 0
      %v941 = vsel %vm417, %v936, 0
      %943 = vmatprep.subr.bf16.mxu0 0
      %944 = vmatpush1.bf16.msra.mxu0 0
      %945 = vmatprep.subr.bf16.mxu0 0
      %946 = vmatpush1.bf16.msra.mxu0 0
      %947 = vmatprep.subr.bf16.mxu0 0
      %948 = vmatpush1.bf16.msra.mxu0 0
      %949 = vmatprep.subr.bf16.mxu0 0
      %950 = vmatpush1.bf16.msra.mxu0 0
      %951 = vmatprep.subr.bf16.mxu0 0
      %952 = vmatpush1.bf16.msra.mxu0 0
      %953 = vmatprep.subr.bf16.mxu0 0
      %954 = vmatpush1.bf16.msra.mxu0 0
      %955 = vmatprep.subr.bf16.mxu0 0
      %956 = vmatpush1.bf16.msra.mxu0 0
      %957 = vmatprep.subr.bf16.mxu0 0
      %958 = vmatpush1.bf16.msra.mxu0 %v941
      %959 = vmatprep.subr.bf16.mxu0 0
      %960 = vmatpush2.bf16.msra.mxu0 0
      %961 = vmatprep.subr.bf16.mxu0 0
      %962 = vmatpush2.bf16.msra.mxu0 0
      %963 = vmatprep.subr.bf16.mxu0 0
      %964 = vmatpush2.bf16.msra.mxu0 0
      %965 = vmatprep.subr.bf16.mxu0 0
      %966 = vmatpush2.bf16.msra.mxu0 0
      %967 = vmatprep.subr.bf16.mxu0 0
      %968 = vmatpush2.bf16.msra.mxu0 0
      %969 = vmatprep.subr.bf16.mxu0 0
      %970 = vmatpush2.bf16.msra.mxu0 0
      %971 = vmatprep.subr.bf16.mxu0 0
      %972 = vmatpush2.bf16.msra.mxu0 0
      %973 = vmatprep.subr.bf16.mxu0 0
      %974 = vmatpush2.bf16.msra.mxu0 0
      %975 = vmatprep.mubr.bf16.mxu0 0
      %976 = vmatmul.mubr.bf16.gmra.mxu0 %v938
      %v977 = vpop.f32.mrf.mxu0
      %v978 = vadd.f32 0.0, %v977
      %v979 = vpop.f32.mrf.mxu0
      %v980 = vpop.f32.mrf.mxu0
      %v981 = vpop.f32.mrf.mxu0
      %982 = vdwg.mxu0
      %v983 = vld [vmem:[#allocation2] sm:$0xff]
      %v984 = vpack.c.bf16 %v978, %v978
      %v985 = vld [vmem:[%s4 + $0xc] sm:$0xf]
      %v987 = vsel %vm354, %v984, 0
      %v990 = vsel %vm417, %v985, 0
      %992 = vmatprep.subr.bf16.mxu0 0
      %993 = vmatpush1.bf16.msra.mxu0 0
      %994 = vmatprep.subr.bf16.mxu0 0
      %995 = vmatpush1.bf16.msra.mxu0 0
      %996 = vmatprep.subr.bf16.mxu0 0
      %997 = vmatpush1.bf16.msra.mxu0 0
      %998 = vmatprep.subr.bf16.mxu0 0
      %999 = vmatpush1.bf16.msra.mxu0 0
      %1000 = vmatprep.subr.bf16.mxu0 0
      %1001 = vmatpush1.bf16.msra.mxu0 0
      %1002 = vmatprep.subr.bf16.mxu0 0
      %1003 = vmatpush1.bf16.msra.mxu0 0
      %1004 = vmatprep.subr.bf16.mxu0 0
      %1005 = vmatpush1.bf16.msra.mxu0 0
      %1006 = vmatprep.subr.bf16.mxu0 0
      %1007 = vmatpush1.bf16.msra.mxu0 %v990
      %1008 = vmatprep.subr.bf16.mxu0 0
      %1009 = vmatpush2.bf16.msra.mxu0 0
      %1010 = vmatprep.subr.bf16.mxu0 0
      %1011 = vmatpush2.bf16.msra.mxu0 0
      %1012 = vmatprep.subr.bf16.mxu0 0
      %1013 = vmatpush2.bf16.msra.mxu0 0
      %1014 = vmatprep.subr.bf16.mxu0 0
      %1015 = vmatpush2.bf16.msra.mxu0 0
      %1016 = vmatprep.subr.bf16.mxu0 0
      %1017 = vmatpush2.bf16.msra.mxu0 0
      %1018 = vmatprep.subr.bf16.mxu0 0
      %1019 = vmatpush2.bf16.msra.mxu0 0
      %1020 = vmatprep.subr.bf16.mxu0 0
      %1021 = vmatpush2.bf16.msra.mxu0 0
      %1022 = vmatprep.subr.bf16.mxu0 0
      %1023 = vmatpush2.bf16.msra.mxu0 0
      %1024 = vmatprep.mubr.bf16.mxu0 0
      %1025 = vmatmul.mubr.bf16.gmra.mxu0 %v987
      %v1026 = vpop.f32.mrf.mxu0
      %v1027 = vadd.f32 0.0, %v1026
      %v1028 = vpop.f32.mrf.mxu0
      %v1029 = vpop.f32.mrf.mxu0
      %v1030 = vpop.f32.mrf.mxu0
      %1031 = vdwg.mxu0
      %v1032 = vadd.f32 %v983, %v1027
      %1033 = vst.msk [vmem:[#allocation2] sm:$0xff] %vm349, %v1032
      %v1034 = vld [vmem:[%s317] sm:$0xff]
      %v1035 = vld [vmem:[#allocation2] sm:$0xff]
      %v1036 = vadd.f32 %v1034, %v1035
      %v1037 = vld [vmem:[%s5] sm:$0x1]
      %v1039 = vlaneseq
      %v1040 = vshrl.u32 %v1039, 7
      %v1041 = vsub.s32 0, %v1040
      %v1042 = vrot.slane %v1037, %v1041
      %v1044 = vadd.f32 %v1036, %v1042
      %1045 = vst.msk [vmem:[%s339] sm:$0xff] %vm349, %v1044
      %p1046 = scmp.lt.s32.totalorder %s21, 1
      %s1047 = scalar_select %p1046, %s21, 1
      %p1048 = scmp.lt.s32.totalorder %s22, 0
      %s1049 = scalar_select %p1048, %s22, 0
      %s1050 = sadd.s32 %s1049, %s1047
      %s1051 = smul.addr %s1050, 8
      %s1052 = scalar_lea.vmem %s6, %s1051
      // Predicated region
      $region45: #{gpt_forward.8} parent=43 // pred_check
        %p1053 = pneg %p199
      $region46: #{gpt_forward.8} parent=43 // pred_check_branch
        %1055 = sbr.rel (%p1053) target = $region48
      $region47: #{gpt_forward.8} parent=43 // pred_region
        _
      $region48: #{gpt_forward.8} parent=43 // pred_fallthru
        _
    $region44: #{gpt_forward.8} parent=5 // pred_fallthru
      _
    %p1056 = scmp.le.s32.totalorder 2, %s12
    // Predicated region
    $region49: #{gpt_forward.8} parent=5 // pred_check
      %p1057 = pneg %p1056
    $region50: #{gpt_forward.8} parent=5 // pred_check_branch
      %1059 = sbr.rel (%p1057) target = $region52
    $region51: #{gpt_forward.8} parent=5 // pred_region
      %s1060 = ssub.s32 %s12, 2
      // Predicated region
      $region53: #{gpt_forward.8} parent=51 // pred_check
        %p1061 = pneg %p205
      $region54: #{gpt_forward.8} parent=51 // pred_check_branch
        %1063 = sbr.rel (%p1061) target = $region56
      $region55: #{gpt_forward.8} parent=51 // pred_region
        %p1064 = scmp.lt.s32.totalorder %s23, 1
        %s1065 = scalar_select %p1064, %s23, 1
        %p1066 = scmp.lt.s32.totalorder %s24, 0
        %s1067 = scalar_select %p1066, %s24, 0
        %s1068 = sadd.s32 %s1067, %s1065
        %s1069 = smul.addr %s1068, 8
        %s1070 = scalar_lea.vmem %s6, %s1069
      $region56: #{gpt_forward.8} parent=51 // pred_fallthru
        _
    $region52: #{gpt_forward.8} parent=5 // pred_fallthru
      _
  $region6: #{gpt_forward.8} parent=0 // loop_footer
    %s16 = sadd.s32 1, %s12
  $region7: #{gpt_forward.8} parent=0 // loop_footer_branch
    %11 = sbr.rel target = $region3
  $region8: #{gpt_forward.8} parent=0 // loop_exit
    _

</llo_original>
